<compile_context>
chip_gen: v6e
topology: v6e:2x2x1
jax: 0.10.0
libtpu: 0.0.40
codegen_flags: <defaults>
</compile_context>

<pallas_src>
import functools

import jax
import jax.numpy as jnp
from jax import lax
from jax.experimental import pallas as pl
from jax.experimental.pallas import tpu as pltpu


def _supcon_kernel(qf_ref, kf_ref, labr_ref, labc_ref, out_ref,
                   m_scr, l_scr, sml_scr, sm_scr, *,
                   inv_temp, loss_scale, n_valid, blk):
    i = pl.program_id(0)          # anchor-row block (parallel)
    j = pl.program_id(1)          # contrast-column block (reduction)
    nj = pl.num_programs(1)

    @pl.when(j == 0)
    def _init():
        m_scr[...] = jnp.full(m_scr.shape, -1e30, jnp.float32)
        l_scr[...] = jnp.zeros(l_scr.shape, jnp.float32)
        sml_scr[...] = jnp.zeros(sml_scr.shape, jnp.float32)
        sm_scr[...] = jnp.zeros(sm_scr.shape, jnp.float32)

    # Scaled Gram tile on the MXU: (q * 1/T) @ k^T, bf16 inputs, f32 accumulation, NT form.
    q = (qf_ref[...].astype(jnp.float32) * inv_temp).astype(jnp.bfloat16)   # [TR, D]
    k = kf_ref[...]                                                         # [TC, D]
    s = lax.dot_general(q, k, (((1,), (1,)), ((), ())),
                        preferred_element_type=jnp.float32)                 # [TR, TC]

    # Masks built in-kernel (no N^2 HBM inputs).
    row_ids = i * blk + lax.broadcasted_iota(jnp.int32, (blk, blk), 0)
    col_ids = j * blk + lax.broadcasted_iota(jnp.int32, (blk, blk), 1)
    col_valid = col_ids < n_valid                        # drop padded columns
    not_diag = row_ids != col_ids                        # logits_mask (self-contrast)
    lmask = jnp.logical_and(not_diag, col_valid)         # denominator mask
    pmask = jnp.logical_and(labr_ref[...] == labc_ref[...], lmask)   # positives mask
    pmask_f = pmask.astype(jnp.float32)

    s_safe = jnp.where(col_valid, s, -1e30)              # padded cols never win the row max

    # --- online softmax statistics (per anchor row), carried in VMEM scratch ---
    m_prev = m_scr[...]
    m_cur = jnp.maximum(m_prev, jnp.max(s_safe, axis=1, keepdims=True))     # [TR, 1]
    alpha = jnp.exp(m_prev - m_cur)
    p = jnp.where(lmask, jnp.exp(s_safe - m_cur), 0.0)
    l_scr[...] = alpha * l_scr[...] + jnp.sum(p, axis=1, keepdims=True)
    # sum(mask*log_prob) factorizes -> only sum(mask*adc) and sum(mask) are needed.
    sml_scr[...] = sml_scr[...] + jnp.sum(pmask_f * s, axis=1, keepdims=True)
    sm_scr[...] = sm_scr[...] + jnp.sum(pmask_f, axis=1, keepdims=True)
    m_scr[...] = m_cur

    @pl.when(j == nj - 1)
    def _finalize():
        eps = jnp.float32(1e-8)
        log_denom = m_scr[...] + jnp.log(l_scr[...] + eps)                  # [TR, 1]
        sm = sm_scr[...]
        mlpp = (sml_scr[...] - log_denom * sm) * pl.reciprocal(sm + eps, approx=True)
        loss_rows = loss_scale * mlpp                                       # [TR, 1]
        row_ids1 = i * blk + lax.broadcasted_iota(jnp.int32, (blk, 1), 0)
        loss_rows = jnp.where(row_ids1 < n_valid, loss_rows, 0.0)           # drop padded rows
        partial = jnp.sum(loss_rows)                                        # per-row-block sum
        # lane-dense (8,128) store of the partial sum; wrapper reads [:, 0, 0].
        out_ref[...] = jnp.zeros(out_ref.shape, jnp.float32) + partial


def supcon_loss(features, labels=None, mask=None, *,
                temperature=0.07, base_temperature=0.07, block_n=256):
    """JAX/Pallas port of SupConLoss.forward (contrast_mode forced to 'all', exactly like
    the PyTorch forward). Supports the `labels` path and the SimCLR path (both None)."""
    features = jnp.asarray(features)
    if features.ndim < 3:
        raise ValueError("`features` needs to be [bsz, n_views, ...]")
    if features.ndim > 3:
        features = features.reshape(features.shape[0], features.shape[1], -1)

    bsz, n_views, d = features.shape

    if labels is not None and mask is not None:
        raise ValueError("Cannot define both `labels` and `mask`")
    if mask is not None:
        # TODO(synk): arbitrary user-supplied [bsz,bsz] masks need an NxN mask stream; only the labels / SimCLR (eye) paths are kernelized.
        raise NotImplementedError("explicit `mask` is not supported by the Pallas kernel")
    if labels is None:
        base_labels = jnp.arange(bsz, dtype=jnp.int32)        # mask = eye(bsz)  (SimCLR)
    else:
        labels = jnp.asarray(labels).reshape(-1)
        if labels.shape[0] != bsz:
            raise ValueError("Num of labels does not match num of features")
        base_labels = labels.astype(jnp.int32)

    # contrast_feature = cat(unbind(features, dim=1), dim=0)  -> view-major [N, D]
    N = bsz * n_views
    cf = jnp.transpose(features, (1, 0, 2)).reshape(N, d)
    anchor_labels = jnp.tile(base_labels, n_views)            # [N] per-anchor label

    # 128-aligned tiles (v5e MXU), 256 by default (v6e/v7x MXU geometry).
    blk = 128 if N <= 128 else int(block_n)
    n_pad = ((N + blk - 1) // blk) * blk
    d_pad = max(128, ((d + 127) // 128) * 128)

    cf = jnp.pad(cf.astype(jnp.bfloat16), ((0, n_pad - N), (0, d_pad - d)))
    lab = jnp.pad(anchor_labels, (0, n_pad - N), constant_values=-1)
    lab_row = lab.reshape(n_pad, 1)
    lab_col = lab.reshape(1, n_pad)

    nb = n_pad // blk
    kernel = functools.partial(
        _supcon_kernel,
        inv_temp=1.0 / float(temperature),
        loss_scale=-(float(temperature) / float(base_temperature)),
        n_valid=N,
        blk=blk,
    )

    partial = pl.pallas_call(
        kernel,
        out_shape=jax.ShapeDtypeStruct((nb, 8, 128), jnp.float32),
        grid=(nb, nb),
        in_specs=[
            pl.BlockSpec((blk, d_pad), lambda i, j: (i, 0)),   # anchor feature rows
            pl.BlockSpec((blk, d_pad), lambda i, j: (j, 0)),   # contrast feature cols
            pl.BlockSpec((blk, 1), lambda i, j: (i, 0)),       # anchor labels  [TR,1]
            pl.BlockSpec((1, blk), lambda i, j: (0, j)),       # contrast labels [1,TC]
        ],
        out_specs=pl.BlockSpec((1, 8, 128), lambda i, j: (i, 0, 0)),
        scratch_shapes=[pltpu.VMEM((blk, 1), jnp.float32) for _ in range(4)],
        compiler_params=pltpu.CompilerParams(
            dimension_semantics=("parallel", "arbitrary"),
            vmem_limit_bytes=48 * 1024 * 1024,
        ),
    )(cf, cf, lab_row, lab_col)

    # mean over the true N anchors (padded rows contribute exactly 0)
    return jnp.sum(partial[:, 0, 0]) / N


def _supcon_loss_ref(features, labels=None, *, temperature=0.07,
                     base_temperature=0.07, emulate_bf16=False):
    """Pure-JAX reference mirroring the PyTorch forward (optionally with the kernel's
    bf16 Gram-matmul quantization) for validation."""
    eps = 1e-8
    features = jnp.asarray(features, jnp.float32)
    bsz, n_views = features.shape[0], features.shape[1]
    if labels is None:
        mask = jnp.eye(bsz, dtype=jnp.float32)
    else:
        labels = jnp.asarray(labels).reshape(-1, 1)
        mask = (labels == labels.T).astype(jnp.float32)
    N = bsz * n_views
    cf = jnp.transpose(features, (1, 0, 2)).reshape(N, -1)
    if emulate_bf16:
        q = cf.astype(jnp.bfloat16).astype(jnp.float32) * jnp.float32(1.0 / temperature)
        q = q.astype(jnp.bfloat16).astype(jnp.float32)
        k = cf.astype(jnp.bfloat16).astype(jnp.float32)
        adc = q @ k.T
    else:
        adc = (cf @ cf.T) / temperature
    logits = adc - jnp.max(adc, axis=1, keepdims=True)
    mask = jnp.tile(mask, (n_views, n_views))
    lmask = 1.0 - jnp.eye(N, dtype=jnp.float32)
    mask = mask * lmask
    exp_logits = jnp.exp(logits) * lmask
    log_prob = logits - jnp.log(jnp.sum(exp_logits, axis=1, keepdims=True) + eps)
    mlpp = jnp.sum(mask * log_prob, axis=1) / (jnp.sum(mask, axis=1) + eps)
    loss = -(temperature / base_temperature) * mlpp
    return jnp.mean(loss)


if __name__ == "__main__":
    key = jax.random.PRNGKey(0)
    kf, kl = jax.random.split(key)

    bsz, n_views, dim = 4, 2, 32
    features = jax.random.normal(kf, (bsz, n_views, dim), dtype=jnp.float32)
    # L2-normalize (typical SupCon usage; keeps bf16 Gram matmul numerically tame)
    features = features / jnp.linalg.norm(features, axis=-1, keepdims=True)
    labels = jax.random.randint(kl, (bsz,), 0, 3)

    # Supervised path.
    loss = jax.block_until_ready(supcon_loss(features, labels=labels))
    ref_match = jax.block_until_ready(
        _supcon_loss_ref(features, labels=labels, emulate_bf16=True))
    ref_f32 = jax.block_until_ready(_supcon_loss_ref(features, labels=labels))
    # Tight check against a reference with the kernel's bf16 matmul numerics ...
    assert jnp.allclose(loss, ref_match, rtol=1e-2, atol=1e-2), (loss, ref_match)
    # ... and a looser check against the full-f32 PyTorch-equivalent reference
    # (bf16 MXU matmul + approx reciprocal account for the small difference).
    assert jnp.allclose(loss, ref_f32, rtol=5e-2, atol=5e-2), (loss, ref_f32)

    # SimCLR (unsupervised) path: labels=None, mask=None.
    loss_u = jax.block_until_ready(supcon_loss(features))
    ref_u = jax.block_until_ready(_supcon_loss_ref(features))
    assert jnp.allclose(loss_u, ref_u, rtol=5e-2, atol=5e-2), (loss_u, ref_u)

    print("KERNEL_OK")
</pallas_src>

<mosaic_0001>
module attributes {stable_mosaic.version = 11 : i64} {
  func.func @_supcon_kernel(%arg0: i32, %arg1: i32, %arg2: memref<128x128xbf16, #tpu.memory_space<vmem>>, %arg3: memref<128x128xbf16, #tpu.memory_space<vmem>>, %arg4: memref<128x1xi32, #tpu.memory_space<vmem>>, %arg5: memref<1x128xi32, #tpu.memory_space<vmem>>, %arg6: memref<1x8x128xf32, #tpu.memory_space<vmem>>, %arg7: memref<128x1xf32, #tpu.memory_space<vmem>>, %arg8: memref<128x1xf32, #tpu.memory_space<vmem>>, %arg9: memref<128x1xf32, #tpu.memory_space<vmem>>, %arg10: memref<128x1xf32, #tpu.memory_space<vmem>>) attributes {dimension_semantics = [#tpu.dimension_semantics<parallel>, #tpu.dimension_semantics<arbitrary>], iteration_bounds = array<i64: 1, 1>, scalar_prefetch = 0 : i64, scratch_operands = 4 : i64, tpu.core_type = #tpu.core_type<tc>, window_params = [{transform_indices = @transform_0, window_bounds = array<i64: 128, 128>}, {transform_indices = @transform_1, window_bounds = array<i64: 128, 128>}, {transform_indices = @transform_2, window_bounds = array<i64: 128, 1>}, {transform_indices = @transform_3, window_bounds = array<i64: 1, 128>}, {transform_indices = @transform_4, window_bounds = array<i64: 1, 8, 128>}]} {
    %c0_i32 = arith.constant 0 : i32
    %0 = arith.cmpi eq, %arg1, %c0_i32 : i32
    %1 = arith.extui %0 : i1 to i32
    %c0_i32_0 = arith.constant 0 : i32
    %2 = arith.cmpi ne, %1, %c0_i32_0 : i32
    scf.if %2 {
      %cst_34 = arith.constant -1.000000e+30 : f32
      %64 = vector.broadcast %cst_34 : f32 to vector<128x1xf32>
      %c0_35 = arith.constant 0 : index
      %c0_36 = arith.constant 0 : index
      %65 = vector.load %arg7[%c0_35, %c0_36] : memref<128x1xf32, #tpu.memory_space<vmem>>, vector<128x1xf32>
      tpu.vector_store %arg7[%c0_35, %c0_36], %64 {strides = array<i32>} : memref<128x1xf32, #tpu.memory_space<vmem>>, vector<128x1xf32>,
      %cst_37 = arith.constant 0.000000e+00 : f32
      %66 = vector.broadcast %cst_37 : f32 to vector<128x1xf32>
      %c0_38 = arith.constant 0 : index
      %c0_39 = arith.constant 0 : index
      %67 = vector.load %arg8[%c0_38, %c0_39] : memref<128x1xf32, #tpu.memory_space<vmem>>, vector<128x1xf32>
      tpu.vector_store %arg8[%c0_38, %c0_39], %66 {strides = array<i32>} : memref<128x1xf32, #tpu.memory_space<vmem>>, vector<128x1xf32>,
      %cst_40 = arith.constant 0.000000e+00 : f32
      %68 = vector.broadcast %cst_40 : f32 to vector<128x1xf32>
      %c0_41 = arith.constant 0 : index
      %c0_42 = arith.constant 0 : index
      %69 = vector.load %arg9[%c0_41, %c0_42] : memref<128x1xf32, #tpu.memory_space<vmem>>, vector<128x1xf32>
      tpu.vector_store %arg9[%c0_41, %c0_42], %68 {strides = array<i32>} : memref<128x1xf32, #tpu.memory_space<vmem>>, vector<128x1xf32>,
      %cst_43 = arith.constant 0.000000e+00 : f32
      %70 = vector.broadcast %cst_43 : f32 to vector<128x1xf32>
      %c0_44 = arith.constant 0 : index
      %c0_45 = arith.constant 0 : index
      %71 = vector.load %arg10[%c0_44, %c0_45] : memref<128x1xf32, #tpu.memory_space<vmem>>, vector<128x1xf32>
      tpu.vector_store %arg10[%c0_44, %c0_45], %70 {strides = array<i32>} : memref<128x1xf32, #tpu.memory_space<vmem>>, vector<128x1xf32>,
    } else {
    }
    %c0 = arith.constant 0 : index
    %c0_1 = arith.constant 0 : index
    %3 = vector.load %arg2[%c0, %c0_1] : memref<128x128xbf16, #tpu.memory_space<vmem>>, vector<128x128xbf16>
    %4 = arith.extf %3 : vector<128x128xbf16> to vector<128x128xf32>
    %cst = arith.constant 14.2857141 : f32
    %5 = vector.broadcast %cst : f32 to vector<128x128xf32>
    %6 = arith.mulf %4, %5 : vector<128x128xf32>
    %7 = arith.truncf %6 : vector<128x128xf32> to vector<128x128xbf16>
    %c0_2 = arith.constant 0 : index
    %c0_3 = arith.constant 0 : index
    %8 = vector.load %arg3[%c0_2, %c0_3] : memref<128x128xbf16, #tpu.memory_space<vmem>>, vector<128x128xbf16>
    %cst_4 = arith.constant dense<0.000000e+00> : vector<128x128xf32>
    %9 = tpu.matmul %7, %8, %cst_4 {dimension_numbers = #tpu.dot_dimension_numbers<[1], [1], [0], [0], [0, 0, 1, 0], [], []>} : vector<128x128xbf16>, vector<128x128xbf16>, vector<128x128xf32> -> vector<128x128xf32>
    %c128_i32 = arith.constant 128 : i32
    %10 = arith.muli %arg0, %c128_i32 : i32
    %11 = tpu.iota {dimensions = array<i32: 0>} : vector<128x128xi32>
    %12 = vector.broadcast %10 : i32 to vector<128x128xi32>
    %13 = arith.addi %12, %11 : vector<128x128xi32>
    %c128_i32_5 = arith.constant 128 : i32
    %14 = arith.muli %arg1, %c128_i32_5 : i32
    %15 = tpu.iota {dimensions = array<i32: 1>} : vector<128x128xi32>
    %16 = vector.broadcast %14 : i32 to vector<128x128xi32>
    %17 = arith.addi %16, %15 : vector<128x128xi32>
    %c8_i32 = arith.constant 8 : i32
    %18 = vector.broadcast %c8_i32 : i32 to vector<128x128xi32>
    %19 = arith.cmpi slt, %17, %18 : vector<128x128xi32>
    %20 = arith.cmpi ne, %13, %17 : vector<128x128xi32>
    %21 = arith.andi %20, %19 : vector<128x128xi1>
    %c0_6 = arith.constant 0 : index
    %c0_7 = arith.constant 0 : index
    %22 = vector.load %arg4[%c0_6, %c0_7] : memref<128x1xi32, #tpu.memory_space<vmem>>, vector<128x1xi32>
    %c0_8 = arith.constant 0 : index
    %c0_9 = arith.constant 0 : index
    %23 = vector.load %arg5[%c0_8, %c0_9] : memref<1x128xi32, #tpu.memory_space<vmem>>, vector<1x128xi32>
    %24 = vector.broadcast %22 : vector<128x1xi32> to vector<128x128xi32>
    %25 = vector.broadcast %23 : vector<1x128xi32> to vector<128x128xi32>
    %26 = arith.cmpi eq, %24, %25 : vector<128x128xi32>
    %27 = arith.andi %26, %21 : vector<128x128xi1>
    %28 = arith.extui %27 : vector<128x128xi1> to vector<128x128xi32>
    %29 = arith.sitofp %28 : vector<128x128xi32> to vector<128x128xf32>
    %cst_10 = arith.constant -1.000000e+30 : f32
    %30 = vector.broadcast %cst_10 : f32 to vector<128x128xf32>
    %31 = arith.select %19, %9, %30 : vector<128x128xi1>, vector<128x128xf32>
    %c0_11 = arith.constant 0 : index
    %c0_12 = arith.constant 0 : index
    %32 = vector.load %arg7[%c0_11, %c0_12] : memref<128x1xf32, #tpu.memory_space<vmem>>, vector<128x1xf32>
    %cst_13 = arith.constant dense<0xFF800000> : vector<128xf32>
    %33 = vector.multi_reduction <maximumf>, %31, %cst_13 [1] : vector<128x128xf32> to vector<128xf32>
    %34 = vector.shape_cast %33 : vector<128xf32> to vector<128x1xf32>
    %35 = arith.maximumf %32, %34 : vector<128x1xf32>
    %36 = arith.subf %32, %35 : vector<128x1xf32>
    %37 = math.exp %36 : vector<128x1xf32>
    %38 = vector.broadcast %35 : vector<128x1xf32> to vector<128x128xf32>
    %39 = arith.subf %31, %38 : vector<128x128xf32>
    %40 = math.exp %39 : vector<128x128xf32>
    %cst_14 = arith.constant 0.000000e+00 : f32
    %41 = vector.broadcast %cst_14 : f32 to vector<128x128xf32>
    %42 = arith.select %21, %40, %41 : vector<128x128xi1>, vector<128x128xf32>
    %c0_15 = arith.constant 0 : index
    %c0_16 = arith.constant 0 : index
    %43 = vector.load %arg8[%c0_15, %c0_16] : memref<128x1xf32, #tpu.memory_space<vmem>>, vector<128x1xf32>
    %44 = arith.mulf %37, %43 : vector<128x1xf32>
    %cst_17 = arith.constant dense<0.000000e+00> : vector<128xf32>
    %45 = vector.multi_reduction <add>, %42, %cst_17 [1] : vector<128x128xf32> to vector<128xf32>
    %46 = vector.shape_cast %45 : vector<128xf32> to vector<128x1xf32>
    %47 = arith.addf %44, %46 : vector<128x1xf32>
    %c0_18 = arith.constant 0 : index
    %c0_19 = arith.constant 0 : index
    %48 = vector.load %arg8[%c0_18, %c0_19] : memref<128x1xf32, #tpu.memory_space<vmem>>, vector<128x1xf32>
    tpu.vector_store %arg8[%c0_18, %c0_19], %47 {strides = array<i32>} : memref<128x1xf32, #tpu.memory_space<vmem>>, vector<128x1xf32>,
    %c0_20 = arith.constant 0 : index
    %c0_21 = arith.constant 0 : index
    %49 = vector.load %arg9[%c0_20, %c0_21] : memref<128x1xf32, #tpu.memory_space<vmem>>, vector<128x1xf32>
    %50 = arith.mulf %29, %9 : vector<128x128xf32>
    %cst_22 = arith.constant dense<0.000000e+00> : vector<128xf32>
    %51 = vector.multi_reduction <add>, %50, %cst_22 [1] : vector<128x128xf32> to vector<128xf32>
    %52 = vector.shape_cast %51 : vector<128xf32> to vector<128x1xf32>
    %53 = arith.addf %49, %52 : vector<128x1xf32>
    %c0_23 = arith.constant 0 : index
    %c0_24 = arith.constant 0 : index
    %54 = vector.load %arg9[%c0_23, %c0_24] : memref<128x1xf32, #tpu.memory_space<vmem>>, vector<128x1xf32>
    tpu.vector_store %arg9[%c0_23, %c0_24], %53 {strides = array<i32>} : memref<128x1xf32, #tpu.memory_space<vmem>>, vector<128x1xf32>,
    %c0_25 = arith.constant 0 : index
    %c0_26 = arith.constant 0 : index
    %55 = vector.load %arg10[%c0_25, %c0_26] : memref<128x1xf32, #tpu.memory_space<vmem>>, vector<128x1xf32>
    %cst_27 = arith.constant dense<0.000000e+00> : vector<128xf32>
    %56 = vector.multi_reduction <add>, %29, %cst_27 [1] : vector<128x128xf32> to vector<128xf32>
    %57 = vector.shape_cast %56 : vector<128xf32> to vector<128x1xf32>
    %58 = arith.addf %55, %57 : vector<128x1xf32>
    %c0_28 = arith.constant 0 : index
    %c0_29 = arith.constant 0 : index
    %59 = vector.load %arg10[%c0_28, %c0_29] : memref<128x1xf32, #tpu.memory_space<vmem>>, vector<128x1xf32>
    tpu.vector_store %arg10[%c0_28, %c0_29], %58 {strides = array<i32>} : memref<128x1xf32, #tpu.memory_space<vmem>>, vector<128x1xf32>,
    %c0_30 = arith.constant 0 : index
    %c0_31 = arith.constant 0 : index
    %60 = vector.load %arg7[%c0_30, %c0_31] : memref<128x1xf32, #tpu.memory_space<vmem>>, vector<128x1xf32>
    tpu.vector_store %arg7[%c0_30, %c0_31], %35 {strides = array<i32>} : memref<128x1xf32, #tpu.memory_space<vmem>>, vector<128x1xf32>,
    %c0_i32_32 = arith.constant 0 : i32
    %61 = arith.cmpi eq, %arg1, %c0_i32_32 : i32
    %62 = arith.extui %61 : i1 to i32
    %c0_i32_33 = arith.constant 0 : i32
    %63 = arith.cmpi ne, %62, %c0_i32_33 : i32
    scf.if %63 {
      %c0_34 = arith.constant 0 : index
      %c0_35 = arith.constant 0 : index
      %64 = vector.load %arg7[%c0_34, %c0_35] : memref<128x1xf32, #tpu.memory_space<vmem>>, vector<128x1xf32>
      %c0_36 = arith.constant 0 : index
      %c0_37 = arith.constant 0 : index
      %65 = vector.load %arg8[%c0_36, %c0_37] : memref<128x1xf32, #tpu.memory_space<vmem>>, vector<128x1xf32>
      %cst_38 = arith.constant 9.99999993E-9 : f32
      %66 = vector.broadcast %cst_38 : f32 to vector<128x1xf32>
      %67 = arith.addf %65, %66 : vector<128x1xf32>
      %68 = math.log %67 : vector<128x1xf32>
      %69 = arith.addf %64, %68 : vector<128x1xf32>
      %c0_39 = arith.constant 0 : index
      %c0_40 = arith.constant 0 : index
      %70 = vector.load %arg10[%c0_39, %c0_40] : memref<128x1xf32, #tpu.memory_space<vmem>>, vector<128x1xf32>
      %c0_41 = arith.constant 0 : index
      %c0_42 = arith.constant 0 : index
      %71 = vector.load %arg9[%c0_41, %c0_42] : memref<128x1xf32, #tpu.memory_space<vmem>>, vector<128x1xf32>
      %72 = arith.mulf %69, %70 : vector<128x1xf32>
      %73 = arith.subf %71, %72 : vector<128x1xf32>
      %cst_43 = arith.constant 9.99999993E-9 : f32
      %74 = vector.broadcast %cst_43 : f32 to vector<128x1xf32>
      %75 = arith.addf %70, %74 : vector<128x1xf32>
      %76 = tpu.reciprocal %75 {approx = true} : vector<128x1xf32> -> vector<128x1xf32>
      %77 = arith.mulf %73, %76 : vector<128x1xf32>
      %cst_44 = arith.constant -1.000000e+00 : f32
      %78 = vector.broadcast %cst_44 : f32 to vector<128x1xf32>
      %79 = arith.mulf %78, %77 : vector<128x1xf32>
      %c128_i32_45 = arith.constant 128 : i32
      %80 = arith.muli %arg0, %c128_i32_45 : i32
      %81 = tpu.iota {dimensions = array<i32: 0>} : vector<128x1xi32>
      %82 = vector.broadcast %80 : i32 to vector<128x1xi32>
      %83 = arith.addi %82, %81 : vector<128x1xi32>
      %c8_i32_46 = arith.constant 8 : i32
      %84 = vector.broadcast %c8_i32_46 : i32 to vector<128x1xi32>
      %85 = arith.cmpi slt, %83, %84 : vector<128x1xi32>
      %cst_47 = arith.constant 0.000000e+00 : f32
      %86 = vector.broadcast %cst_47 : f32 to vector<128x1xf32>
      %87 = arith.select %85, %79, %86 : vector<128x1xi1>, vector<128x1xf32>
      %88 = vector.shape_cast %87 : vector<128x1xf32> to vector<1x128x1xf32>
      %cst_48 = arith.constant dense<0.000000e+00> : vector<1xf32>
      %89 = vector.multi_reduction <add>, %88, %cst_48 [1, 2] : vector<1x128x1xf32> to vector<1xf32>
      %90 = vector.shape_cast %89 : vector<1xf32> to vector<1x1x1xf32>
      %91 = vector.extract %90[0, 0, 0] : f32 from vector<1x1x1xf32>
      %cst_49 = arith.constant 0.000000e+00 : f32
      %92 = vector.broadcast %cst_49 : f32 to vector<1x8x128xf32>
      %93 = vector.broadcast %91 : f32 to vector<1x8x128xf32>
      %94 = arith.addf %92, %93 : vector<1x8x128xf32>
      %c0_50 = arith.constant 0 : index
      %c0_51 = arith.constant 0 : index
      %c0_52 = arith.constant 0 : index
      %95 = vector.load %arg6[%c0_50, %c0_51, %c0_52] : memref<1x8x128xf32, #tpu.memory_space<vmem>>, vector<1x8x128xf32>
      tpu.vector_store %arg6[%c0_50, %c0_51, %c0_52], %94 {strides = array<i32>} : memref<1x8x128xf32, #tpu.memory_space<vmem>>, vector<1x8x128xf32>,
    } else {
    }
    return
  }
  func.func @transform_0(%arg0: i32, %arg1: i32) -> (i32, i32) {
    %c0_i32 = arith.constant 0 : i32
    %c0_i32_0 = arith.constant 0 : i32
    return %arg0, %c0_i32 : i32, i32
  }
  func.func @transform_1(%arg0: i32, %arg1: i32) -> (i32, i32) {
    %c0_i32 = arith.constant 0 : i32
    %c0_i32_0 = arith.constant 0 : i32
    return %arg1, %c0_i32 : i32, i32
  }
  func.func @transform_2(%arg0: i32, %arg1: i32) -> (i32, i32) {
    %c0_i32 = arith.constant 0 : i32
    %c0_i32_0 = arith.constant 0 : i32
    return %arg0, %c0_i32 : i32, i32
  }
  func.func @transform_3(%arg0: i32, %arg1: i32) -> (i32, i32) {
    %c0_i32 = arith.constant 0 : i32
    %c0_i32_0 = arith.constant 0 : i32
    return %c0_i32, %arg1 : i32, i32
  }
  func.func @transform_4(%arg0: i32, %arg1: i32) -> (i32, i32, i32) {
    %c0_i32 = arith.constant 0 : i32
    %c0_i32_0 = arith.constant 0 : i32
    %c0_i32_1 = arith.constant 0 : i32
    return %arg0, %c0_i32, %c0_i32_0 : i32, i32, i32
  }
}

</mosaic_0001>

<llo_original>
// kernel: tpu_custom_call.1
$region0: #{tpu_custom_call.1}
  #allocation0 [shape = 'u32[]', space=smem, size = 0x4, offset = 0x4, fixed_abs, tag = 'smem constant byte address 0x4 - core index']
  #allocation1 [shape = 'u32[144,128]{1,0:T(1,128)}', space=vmem, size = 0x12000, scoped, tag = 'internal scratch']
  #allocation2 [shape = 'f32[128,1]{1,0:T(8,128)}', space=vmem, size = 0x10000, scoped, tag = 'scratch operand']
  #allocation3 [shape = 'f32[128,1]{1,0:T(8,128)}', space=vmem, size = 0x10000, scoped, tag = 'scratch operand']
  #allocation4 [shape = 'f32[128,1]{1,0:T(8,128)}', space=vmem, size = 0x10000, scoped, tag = 'scratch operand']
  #allocation5 [shape = 'f32[128,1]{1,0:T(8,128)}', space=vmem, size = 0x10000, scoped, tag = 'scratch operand']
  %s0 = inlined_call_operand.vmem [shape: bf16[128,128], index: 0, kind: input, shape index: {}]
  %s1 = inlined_call_operand.vmem [shape: bf16[128,128], index: 1, kind: input, shape index: {}]
  %s2 = inlined_call_operand.vmem [shape: s32[128,1], index: 2, kind: input, shape index: {}]
  %s3 = inlined_call_operand.vmem [shape: s32[1,128], index: 3, kind: input, shape index: {}]
  %s4 = inlined_call_operand.hbm [shape: f32[1,8,128], index: 4, kind: output, shape index: {}]
  %s5 = sld [smem:[#allocation0]]
  $region34: #{tpu_custom_call.1} parent=0
    _
  %s7 = ssub.s32 1, %s5
  %s8 = scalar_select 0, %s7, %s5
  $region1: #{tpu_custom_call.1} parent=0
    #allocation6 [shape = 'u8[4096]{0}', space=vmem, size = 0x1000, scoped, tag = 'output window, operand 0, single buffered']
    #allocation7 [shape = 's32[1]{0}', space=sflag, size = 0x4, scoped, tag = 'scoped memory for tpu_custom_call.1']
    %9 = vsyncpa [#allocation7], 0
    // Predicated region
    $region2: #{tpu_custom_call.1} parent=1 // pred_check
      _
    $region3: #{tpu_custom_call.1} parent=1 // pred_check_branch
      %11 = sbr.rel (0) target = $region5
    $region4: #{tpu_custom_call.1} parent=1 // pred_region
      _
    $region5: #{tpu_custom_call.1} parent=1 // pred_fallthru
      _
    // Predicated region
    $region6: #{tpu_custom_call.1} parent=1 // pred_check
      _
    $region7: #{tpu_custom_call.1} parent=1 // pred_check_branch
      %13 = sbr.rel (0) target = $region9
    $region8: #{tpu_custom_call.1} parent=1 // pred_region
      _
    $region9: #{tpu_custom_call.1} parent=1 // pred_fallthru
      _
    // Predicated region
    $region10: #{tpu_custom_call.1} parent=1 // pred_check
      _
    $region11: #{tpu_custom_call.1} parent=1 // pred_check_branch
      %15 = sbr.rel (0) target = $region13
    $region12: #{tpu_custom_call.1} parent=1 // pred_region
      _
    $region13: #{tpu_custom_call.1} parent=1 // pred_fallthru
      _
    // Predicated region
    $region14: #{tpu_custom_call.1} parent=1 // pred_check
      _
    $region15: #{tpu_custom_call.1} parent=1 // pred_check_branch
      %17 = sbr.rel (0) target = $region17
    $region16: #{tpu_custom_call.1} parent=1 // pred_region
      _
    $region17: #{tpu_custom_call.1} parent=1 // pred_fallthru
      _
    %p19 = scmp.eq.s32.totalorder 0, 0
    // Predicated region
    $region18: #{tpu_custom_call.1} parent=1 // pred_check
      %p20 = pneg %p19
    $region19: #{tpu_custom_call.1} parent=1 // pred_check_branch
      %22 = sbr.rel (%p20) target = $region21
    $region20: #{tpu_custom_call.1} parent=1 // pred_region
      %vm23 = vcmask 7168
      %24 = vst.msk [vmem:[#allocation2] sm:$0xff] %vm23, -1e+30
      %25 = vst.msk [vmem:[#allocation2 + $0x8] sm:$0xff] %vm23, -1e+30
      %26 = vst.msk [vmem:[#allocation2 + $0x10] sm:$0xff] %vm23, -1e+30
      %27 = vst.msk [vmem:[#allocation2 + $0x18] sm:$0xff] %vm23, -1e+30
      %28 = vst.msk [vmem:[#allocation2 + $0x20] sm:$0xff] %vm23, -1e+30
      %29 = vst.msk [vmem:[#allocation2 + $0x28] sm:$0xff] %vm23, -1e+30
      %30 = vst.msk [vmem:[#allocation2 + $0x30] sm:$0xff] %vm23, -1e+30
      %31 = vst.msk [vmem:[#allocation2 + $0x38] sm:$0xff] %vm23, -1e+30
      %32 = vst.msk [vmem:[#allocation2 + $0x40] sm:$0xff] %vm23, -1e+30
      %33 = vst.msk [vmem:[#allocation2 + $0x48] sm:$0xff] %vm23, -1e+30
      %34 = vst.msk [vmem:[#allocation2 + $0x50] sm:$0xff] %vm23, -1e+30
      %35 = vst.msk [vmem:[#allocation2 + $0x58] sm:$0xff] %vm23, -1e+30
      %36 = vst.msk [vmem:[#allocation2 + $0x60] sm:$0xff] %vm23, -1e+30
      %37 = vst.msk [vmem:[#allocation2 + $0x68] sm:$0xff] %vm23, -1e+30
      %38 = vst.msk [vmem:[#allocation2 + $0x70] sm:$0xff] %vm23, -1e+30
      %39 = vst.msk [vmem:[#allocation2 + $0x78] sm:$0xff] %vm23, -1e+30
      %40 = vst.msk [vmem:[#allocation3] sm:$0xff] %vm23, 0.0
      %41 = vst.msk [vmem:[#allocation3 + $0x8] sm:$0xff] %vm23, 0.0
      %42 = vst.msk [vmem:[#allocation3 + $0x10] sm:$0xff] %vm23, 0.0
      %43 = vst.msk [vmem:[#allocation3 + $0x18] sm:$0xff] %vm23, 0.0
      %44 = vst.msk [vmem:[#allocation3 + $0x20] sm:$0xff] %vm23, 0.0
      %45 = vst.msk [vmem:[#allocation3 + $0x28] sm:$0xff] %vm23, 0.0
      %46 = vst.msk [vmem:[#allocation3 + $0x30] sm:$0xff] %vm23, 0.0
      %47 = vst.msk [vmem:[#allocation3 + $0x38] sm:$0xff] %vm23, 0.0
      %48 = vst.msk [vmem:[#allocation3 + $0x40] sm:$0xff] %vm23, 0.0
      %49 = vst.msk [vmem:[#allocation3 + $0x48] sm:$0xff] %vm23, 0.0
      %50 = vst.msk [vmem:[#allocation3 + $0x50] sm:$0xff] %vm23, 0.0
      %51 = vst.msk [vmem:[#allocation3 + $0x58] sm:$0xff] %vm23, 0.0
      %52 = vst.msk [vmem:[#allocation3 + $0x60] sm:$0xff] %vm23, 0.0
      %53 = vst.msk [vmem:[#allocation3 + $0x68] sm:$0xff] %vm23, 0.0
      %54 = vst.msk [vmem:[#allocation3 + $0x70] sm:$0xff] %vm23, 0.0
      %55 = vst.msk [vmem:[#allocation3 + $0x78] sm:$0xff] %vm23, 0.0
      %56 = vst.msk [vmem:[#allocation4] sm:$0xff] %vm23, 0.0
      %57 = vst.msk [vmem:[#allocation4 + $0x8] sm:$0xff] %vm23, 0.0
      %58 = vst.msk [vmem:[#allocation4 + $0x10] sm:$0xff] %vm23, 0.0
      %59 = vst.msk [vmem:[#allocation4 + $0x18] sm:$0xff] %vm23, 0.0
      %60 = vst.msk [vmem:[#allocation4 + $0x20] sm:$0xff] %vm23, 0.0
      %61 = vst.msk [vmem:[#allocation4 + $0x28] sm:$0xff] %vm23, 0.0
      %62 = vst.msk [vmem:[#allocation4 + $0x30] sm:$0xff] %vm23, 0.0
      %63 = vst.msk [vmem:[#allocation4 + $0x38] sm:$0xff] %vm23, 0.0
      %64 = vst.msk [vmem:[#allocation4 + $0x40] sm:$0xff] %vm23, 0.0
      %65 = vst.msk [vmem:[#allocation4 + $0x48] sm:$0xff] %vm23, 0.0
      %66 = vst.msk [vmem:[#allocation4 + $0x50] sm:$0xff] %vm23, 0.0
      %67 = vst.msk [vmem:[#allocation4 + $0x58] sm:$0xff] %vm23, 0.0
      %68 = vst.msk [vmem:[#allocation4 + $0x60] sm:$0xff] %vm23, 0.0
      %69 = vst.msk [vmem:[#allocation4 + $0x68] sm:$0xff] %vm23, 0.0
      %70 = vst.msk [vmem:[#allocation4 + $0x70] sm:$0xff] %vm23, 0.0
      %71 = vst.msk [vmem:[#allocation4 + $0x78] sm:$0xff] %vm23, 0.0
      %72 = vst.msk [vmem:[#allocation5] sm:$0xff] %vm23, 0.0
      %73 = vst.msk [vmem:[#allocation5 + $0x8] sm:$0xff] %vm23, 0.0
      %74 = vst.msk [vmem:[#allocation5 + $0x10] sm:$0xff] %vm23, 0.0
      %75 = vst.msk [vmem:[#allocation5 + $0x18] sm:$0xff] %vm23, 0.0
      %76 = vst.msk [vmem:[#allocation5 + $0x20] sm:$0xff] %vm23, 0.0
      %77 = vst.msk [vmem:[#allocation5 + $0x28] sm:$0xff] %vm23, 0.0
      %78 = vst.msk [vmem:[#allocation5 + $0x30] sm:$0xff] %vm23, 0.0
      %79 = vst.msk [vmem:[#allocation5 + $0x38] sm:$0xff] %vm23, 0.0
      %80 = vst.msk [vmem:[#allocation5 + $0x40] sm:$0xff] %vm23, 0.0
      %81 = vst.msk [vmem:[#allocation5 + $0x48] sm:$0xff] %vm23, 0.0
      %82 = vst.msk [vmem:[#allocation5 + $0x50] sm:$0xff] %vm23, 0.0
      %83 = vst.msk [vmem:[#allocation5 + $0x58] sm:$0xff] %vm23, 0.0
      %84 = vst.msk [vmem:[#allocation5 + $0x60] sm:$0xff] %vm23, 0.0
      %85 = vst.msk [vmem:[#allocation5 + $0x68] sm:$0xff] %vm23, 0.0
      %86 = vst.msk [vmem:[#allocation5 + $0x70] sm:$0xff] %vm23, 0.0
      %87 = vst.msk [vmem:[#allocation5 + $0x78] sm:$0xff] %vm23, 0.0
    $region21: #{tpu_custom_call.1} parent=1 // pred_fallthru
      _
    %v88 = vld [vmem:[%s0] sm:$0xf]
    %v89 = vld [vmem:[%s0 + $0x4] sm:$0xf]
    %v90 = vld [vmem:[%s0 + $0x8] sm:$0xf]
    %v91 = vld [vmem:[%s0 + $0xc] sm:$0xf]
    %v92 = vld [vmem:[%s0 + $0x10] sm:$0xf]
    %v93 = vld [vmem:[%s0 + $0x14] sm:$0xf]
    %v94 = vld [vmem:[%s0 + $0x18] sm:$0xf]
    %v95 = vld [vmem:[%s0 + $0x1c] sm:$0xf]
    %v96 = vld [vmem:[%s0 + $0x20] sm:$0xf]
    %v97 = vld [vmem:[%s0 + $0x24] sm:$0xf]
    %v98 = vld [vmem:[%s0 + $0x28] sm:$0xf]
    %v99 = vld [vmem:[%s0 + $0x2c] sm:$0xf]
    %v100 = vld [vmem:[%s0 + $0x30] sm:$0xf]
    %v101 = vld [vmem:[%s0 + $0x34] sm:$0xf]
    %v102 = vld [vmem:[%s0 + $0x38] sm:$0xf]
    %v103 = vld [vmem:[%s0 + $0x3c] sm:$0xf]
    %v104 = vunpack.c.l.bf16 %v88
    %v105 = vunpack.c.l.bf16 %v89
    %v106 = vunpack.c.l.bf16 %v90
    %v107 = vunpack.c.l.bf16 %v91
    %v108 = vunpack.c.l.bf16 %v92
    %v109 = vunpack.c.l.bf16 %v93
    %v110 = vunpack.c.l.bf16 %v94
    %v111 = vunpack.c.l.bf16 %v95
    %v112 = vunpack.c.l.bf16 %v96
    %v113 = vunpack.c.l.bf16 %v97
    %v114 = vunpack.c.l.bf16 %v98
    %v115 = vunpack.c.l.bf16 %v99
    %v116 = vunpack.c.l.bf16 %v100
    %v117 = vunpack.c.l.bf16 %v101
    %v118 = vunpack.c.l.bf16 %v102
    %v119 = vunpack.c.l.bf16 %v103
    %v120 = vmul.f32 %v104, 14.285714
    %v121 = vmul.f32 %v105, 14.285714
    %v122 = vmul.f32 %v106, 14.285714
    %v123 = vmul.f32 %v107, 14.285714
    %v124 = vmul.f32 %v108, 14.285714
    %v125 = vmul.f32 %v109, 14.285714
    %v126 = vmul.f32 %v110, 14.285714
    %v127 = vmul.f32 %v111, 14.285714
    %v128 = vmul.f32 %v112, 14.285714
    %v129 = vmul.f32 %v113, 14.285714
    %v130 = vmul.f32 %v114, 14.285714
    %v131 = vmul.f32 %v115, 14.285714
    %v132 = vmul.f32 %v116, 14.285714
    %v133 = vmul.f32 %v117, 14.285714
    %v134 = vmul.f32 %v118, 14.285714
    %v135 = vmul.f32 %v119, 14.285714
    %v136 = vpack.c.bf16 %v121, %v120
    %v137 = vpack.c.bf16 %v123, %v122
    %v138 = vpack.c.bf16 %v125, %v124
    %v139 = vpack.c.bf16 %v127, %v126
    %v140 = vpack.c.bf16 %v129, %v128
    %v141 = vpack.c.bf16 %v131, %v130
    %v142 = vpack.c.bf16 %v133, %v132
    %v143 = vpack.c.bf16 %v135, %v134
    %v144 = vld [vmem:[%s1] sm:$0xf]
    %v145 = vld [vmem:[%s1 + $0x4] sm:$0xf]
    %v146 = vld [vmem:[%s1 + $0x8] sm:$0xf]
    %v147 = vld [vmem:[%s1 + $0xc] sm:$0xf]
    %v148 = vld [vmem:[%s1 + $0x10] sm:$0xf]
    %v149 = vld [vmem:[%s1 + $0x14] sm:$0xf]
    %v150 = vld [vmem:[%s1 + $0x18] sm:$0xf]
    %v151 = vld [vmem:[%s1 + $0x1c] sm:$0xf]
    %v152 = vld [vmem:[%s1 + $0x20] sm:$0xf]
    %v153 = vld [vmem:[%s1 + $0x24] sm:$0xf]
    %v154 = vld [vmem:[%s1 + $0x28] sm:$0xf]
    %v155 = vld [vmem:[%s1 + $0x2c] sm:$0xf]
    %v156 = vld [vmem:[%s1 + $0x30] sm:$0xf]
    %v157 = vld [vmem:[%s1 + $0x34] sm:$0xf]
    %v158 = vld [vmem:[%s1 + $0x38] sm:$0xf]
    %v159 = vld [vmem:[%s1 + $0x3c] sm:$0xf]
    %v176 = vunpack.c.l.b16 %v144
    %v177 = vunpack.c.l.b16 %v145
    %v178 = vunpack.c.l.b16 %v146
    %v179 = vunpack.c.l.b16 %v147
    %v180 = vunpack.c.l.b16 %v148
    %v181 = vunpack.c.l.b16 %v149
    %v182 = vunpack.c.l.b16 %v150
    %v183 = vunpack.c.l.b16 %v151
    %v184 = vunpack.c.l.b16 %v152
    %v185 = vunpack.c.l.b16 %v153
    %v186 = vunpack.c.l.b16 %v154
    %v187 = vunpack.c.l.b16 %v155
    %v188 = vunpack.c.l.b16 %v156
    %v189 = vunpack.c.l.b16 %v157
    %v190 = vunpack.c.l.b16 %v158
    %v191 = vunpack.c.l.b16 %v159
    %v192 = vpack.c.b16 %v177, %v176
    %v193 = vpack.c.b16 %v179, %v178
    %v194 = vpack.c.b16 %v181, %v180
    %v195 = vpack.c.b16 %v183, %v182
    %v196 = vpack.c.b16 %v185, %v184
    %v197 = vpack.c.b16 %v187, %v186
    %v198 = vpack.c.b16 %v189, %v188
    %v199 = vpack.c.b16 %v191, %v190
    %208 = vmatprep.subr.bf16.mxu0 0
    %209 = vmatpush1.bf16.xpose.msra.mxu0 %v199
    %210 = vmatprep.subr.bf16.mxu0 0
    %211 = vmatpush1.bf16.xpose.msra.mxu0 %v198
    %212 = vmatprep.subr.bf16.mxu0 0
    %213 = vmatpush1.bf16.xpose.msra.mxu0 %v197
    %214 = vmatprep.subr.bf16.mxu0 0
    %215 = vmatpush1.bf16.xpose.msra.mxu0 %v196
    %216 = vmatprep.subr.bf16.mxu0 0
    %217 = vmatpush1.bf16.xpose.msra.mxu0 %v195
    %218 = vmatprep.subr.bf16.mxu0 0
    %219 = vmatpush1.bf16.xpose.msra.mxu0 %v194
    %220 = vmatprep.subr.bf16.mxu0 0
    %221 = vmatpush1.bf16.xpose.msra.mxu0 %v193
    %222 = vmatprep.subr.bf16.mxu0 0
    %223 = vmatpush1.bf16.xpose.msra.mxu0 %v192
    %224 = vmatprep.subr.bf16.mxu0 0
    %225 = vmatpush2.bf16.xpose.msra.mxu0 0
    %226 = vmatprep.subr.bf16.mxu0 0
    %227 = vmatpush2.bf16.xpose.msra.mxu0 0
    %228 = vmatprep.subr.bf16.mxu0 0
    %229 = vmatpush2.bf16.xpose.msra.mxu0 0
    %230 = vmatprep.subr.bf16.mxu0 0
    %231 = vmatpush2.bf16.xpose.msra.mxu0 0
    %232 = vmatprep.subr.bf16.mxu0 0
    %233 = vmatpush2.bf16.xpose.msra.mxu0 0
    %234 = vmatprep.subr.bf16.mxu0 0
    %235 = vmatpush2.bf16.xpose.msra.mxu0 0
    %236 = vmatprep.subr.bf16.mxu0 0
    %237 = vmatpush2.bf16.xpose.msra.mxu0 0
    %238 = vmatprep.subr.bf16.mxu0 0
    %239 = vmatpush2.bf16.xpose.msra.mxu0 0
    %240 = vmatprep.mubr.bf16.mxu0 0
    %241 = vmatmul.mubr.bf16.gmra.mxu0 %v136
    %v242 = vpop.f32.mrf.mxu0
    %v243 = vadd.f32 0.0, %v242
    %v244 = vpop.f32.mrf.mxu0
    %v245 = vpop.f32.mrf.mxu0
    %v246 = vadd.f32 0.0, %v245
    %v247 = vpop.f32.mrf.mxu0
    %248 = vmatprep.mubr.bf16.mxu0 0
    %249 = vmatmul.mubr.bf16.gmra.mxu0 %v137
    %v250 = vpop.f32.mrf.mxu0
    %v251 = vadd.f32 0.0, %v250
    %v252 = vpop.f32.mrf.mxu0
    %v253 = vpop.f32.mrf.mxu0
    %v254 = vadd.f32 0.0, %v253
    %v255 = vpop.f32.mrf.mxu0
    %256 = vmatprep.mubr.bf16.mxu0 0
    %257 = vmatmul.mubr.bf16.gmra.mxu0 %v138
    %v258 = vpop.f32.mrf.mxu0
    %v259 = vadd.f32 0.0, %v258
    %v260 = vpop.f32.mrf.mxu0
    %v261 = vpop.f32.mrf.mxu0
    %v262 = vadd.f32 0.0, %v261
    %v263 = vpop.f32.mrf.mxu0
    %264 = vmatprep.mubr.bf16.mxu0 0
    %265 = vmatmul.mubr.bf16.gmra.mxu0 %v139
    %v266 = vpop.f32.mrf.mxu0
    %v267 = vadd.f32 0.0, %v266
    %v268 = vpop.f32.mrf.mxu0
    %v269 = vpop.f32.mrf.mxu0
    %v270 = vadd.f32 0.0, %v269
    %v271 = vpop.f32.mrf.mxu0
    %272 = vmatprep.mubr.bf16.mxu0 0
    %273 = vmatmul.mubr.bf16.gmra.mxu0 %v140
    %v274 = vpop.f32.mrf.mxu0
    %v275 = vadd.f32 0.0, %v274
    %v276 = vpop.f32.mrf.mxu0
    %v277 = vpop.f32.mrf.mxu0
    %v278 = vadd.f32 0.0, %v277
    %v279 = vpop.f32.mrf.mxu0
    %280 = vmatprep.mubr.bf16.mxu0 0
    %281 = vmatmul.mubr.bf16.gmra.mxu0 %v141
    %v282 = vpop.f32.mrf.mxu0
    %v283 = vadd.f32 0.0, %v282
    %v284 = vpop.f32.mrf.mxu0
    %v285 = vpop.f32.mrf.mxu0
    %v286 = vadd.f32 0.0, %v285
    %v287 = vpop.f32.mrf.mxu0
    %288 = vmatprep.mubr.bf16.mxu0 0
    %289 = vmatmul.mubr.bf16.gmra.mxu0 %v142
    %v290 = vpop.f32.mrf.mxu0
    %v291 = vadd.f32 0.0, %v290
    %v292 = vpop.f32.mrf.mxu0
    %v293 = vpop.f32.mrf.mxu0
    %v294 = vadd.f32 0.0, %v293
    %v295 = vpop.f32.mrf.mxu0
    %296 = vmatprep.mubr.bf16.mxu0 0
    %297 = vmatmul.mubr.bf16.gmra.mxu0 %v143
    %v298 = vpop.f32.mrf.mxu0
    %v299 = vadd.f32 0.0, %v298
    %v300 = vpop.f32.mrf.mxu0
    %v301 = vpop.f32.mrf.mxu0
    %v302 = vadd.f32 0.0, %v301
    %v303 = vpop.f32.mrf.mxu0
    %304 = vdwg.mxu0
    %s305 = smul.u32 0, 128
    %v306 = vlaneseq
    %v307 = vshrl.u32 %v306, 7
    %v308 = vadd.s32 %v307, 8
    %v309 = vadd.s32 %v307, 16
    %v310 = vadd.s32 %v307, 24
    %v311 = vadd.s32 %v307, 32
    %v312 = vadd.s32 %v307, 40
    %v313 = vadd.s32 %v307, 48
    %v314 = vadd.s32 %v307, 56
    %v315 = vadd.s32 %v307, 64
    %v316 = vadd.s32 %v307, 72
    %v317 = vadd.s32 %v307, 80
    %v318 = vadd.s32 %v307, 88
    %v319 = vadd.s32 %v307, 96
    %v320 = vadd.s32 %v307, 104
    %v321 = vadd.s32 %v307, 112
    %v322 = vadd.s32 %v307, 120
    %v323 = vstv %s305
    %v324 = vadd.s32 %v323, %v307
    %v325 = vadd.s32 %v323, %v308
    %v326 = vadd.s32 %v323, %v309
    %v327 = vadd.s32 %v323, %v310
    %v328 = vadd.s32 %v323, %v311
    %v329 = vadd.s32 %v323, %v312
    %v330 = vadd.s32 %v323, %v313
    %v331 = vadd.s32 %v323, %v314
    %v332 = vadd.s32 %v323, %v315
    %v333 = vadd.s32 %v323, %v316
    %v334 = vadd.s32 %v323, %v317
    %v335 = vadd.s32 %v323, %v318
    %v336 = vadd.s32 %v323, %v319
    %v337 = vadd.s32 %v323, %v320
    %v338 = vadd.s32 %v323, %v321
    %v339 = vadd.s32 %v323, %v322
    %s340 = smul.u32 0, 128
    %v341 = vlaneseq
    %v342 = vand.u32 %v341, 127
    %v343 = vstv %s340
    %v344 = vadd.s32 %v343, %v342
    %vm345 = vcmp.lt.s32.totalorder %v344, 8
    %vm346 = vcmp.ne.s32.totalorder %v324, %v344
    %vm347 = vcmp.ne.s32.totalorder %v325, %v344
    %vm348 = vcmp.ne.s32.totalorder %v326, %v344
    %vm349 = vcmp.ne.s32.totalorder %v327, %v344
    %vm350 = vcmp.ne.s32.totalorder %v328, %v344
    %vm351 = vcmp.ne.s32.totalorder %v329, %v344
    %vm352 = vcmp.ne.s32.totalorder %v330, %v344
    %vm353 = vcmp.ne.s32.totalorder %v331, %v344
    %vm354 = vcmp.ne.s32.totalorder %v332, %v344
    %vm355 = vcmp.ne.s32.totalorder %v333, %v344
    %vm356 = vcmp.ne.s32.totalorder %v334, %v344
    %vm357 = vcmp.ne.s32.totalorder %v335, %v344
    %vm358 = vcmp.ne.s32.totalorder %v336, %v344
    %vm359 = vcmp.ne.s32.totalorder %v337, %v344
    %vm360 = vcmp.ne.s32.totalorder %v338, %v344
    %vm361 = vcmp.ne.s32.totalorder %v339, %v344
    %vm362 = vmand %vm346, %vm345
    %vm363 = vmand %vm347, %vm345
    %vm364 = vmand %vm348, %vm345
    %vm365 = vmand %vm349, %vm345
    %vm366 = vmand %vm350, %vm345
    %vm367 = vmand %vm351, %vm345
    %vm368 = vmand %vm352, %vm345
    %vm369 = vmand %vm353, %vm345
    %vm370 = vmand %vm354, %vm345
    %vm371 = vmand %vm355, %vm345
    %vm372 = vmand %vm356, %vm345
    %vm373 = vmand %vm357, %vm345
    %vm374 = vmand %vm358, %vm345
    %vm375 = vmand %vm359, %vm345
    %vm376 = vmand %vm360, %vm345
    %vm377 = vmand %vm361, %vm345
    %v378 = vld [vmem:[%s2] sm:$0xff]
    %v379 = vld [vmem:[%s2 + $0x8] sm:$0xff]
    %v380 = vld [vmem:[%s2 + $0x10] sm:$0xff]
    %v381 = vld [vmem:[%s2 + $0x18] sm:$0xff]
    %v382 = vld [vmem:[%s2 + $0x20] sm:$0xff]
    %v383 = vld [vmem:[%s2 + $0x28] sm:$0xff]
    %v384 = vld [vmem:[%s2 + $0x30] sm:$0xff]
    %v385 = vld [vmem:[%s2 + $0x38] sm:$0xff]
    %v386 = vld [vmem:[%s2 + $0x40] sm:$0xff]
    %v387 = vld [vmem:[%s2 + $0x48] sm:$0xff]
    %v388 = vld [vmem:[%s2 + $0x50] sm:$0xff]
    %v389 = vld [vmem:[%s2 + $0x58] sm:$0xff]
    %v390 = vld [vmem:[%s2 + $0x60] sm:$0xff]
    %v391 = vld [vmem:[%s2 + $0x68] sm:$0xff]
    %v392 = vld [vmem:[%s2 + $0x70] sm:$0xff]
    %v393 = vld [vmem:[%s2 + $0x78] sm:$0xff]
    %v394 = vld [vmem:[%s3] sm:$0x1]
    %395 = vset.pattern.permute.xlu0 0
    %396 = vperm.xlu0 %395, %v378
    %v397 = vpop.permute.xlu0 %396
    %398 = vset.pattern.permute.xlu0 0
    %399 = vperm.xlu0 %398, %v379
    %v400 = vpop.permute.xlu0 %399
    %401 = vset.pattern.permute.xlu0 0
    %402 = vperm.xlu0 %401, %v380
    %v403 = vpop.permute.xlu0 %402
    %404 = vset.pattern.permute.xlu0 0
    %405 = vperm.xlu0 %404, %v381
    %v406 = vpop.permute.xlu0 %405
    %407 = vset.pattern.permute.xlu0 0
    %408 = vperm.xlu0 %407, %v382
    %v409 = vpop.permute.xlu0 %408
    %410 = vset.pattern.permute.xlu0 0
    %411 = vperm.xlu0 %410, %v383
    %v412 = vpop.permute.xlu0 %411
    %413 = vset.pattern.permute.xlu0 0
    %414 = vperm.xlu0 %413, %v384
    %v415 = vpop.permute.xlu0 %414
    %416 = vset.pattern.permute.xlu0 0
    %417 = vperm.xlu0 %416, %v385
    %v418 = vpop.permute.xlu0 %417
    %419 = vset.pattern.permute.xlu0 0
    %420 = vperm.xlu0 %419, %v386
    %v421 = vpop.permute.xlu0 %420
    %422 = vset.pattern.permute.xlu0 0
    %423 = vperm.xlu0 %422, %v387
    %v424 = vpop.permute.xlu0 %423
    %425 = vset.pattern.permute.xlu0 0
    %426 = vperm.xlu0 %425, %v388
    %v427 = vpop.permute.xlu0 %426
    %428 = vset.pattern.permute.xlu0 0
    %429 = vperm.xlu0 %428, %v389
    %v430 = vpop.permute.xlu0 %429
    %431 = vset.pattern.permute.xlu0 0
    %432 = vperm.xlu0 %431, %v390
    %v433 = vpop.permute.xlu0 %432
    %434 = vset.pattern.permute.xlu0 0
    %435 = vperm.xlu0 %434, %v391
    %v436 = vpop.permute.xlu0 %435
    %437 = vset.pattern.permute.xlu0 0
    %438 = vperm.xlu0 %437, %v392
    %v439 = vpop.permute.xlu0 %438
    %440 = vset.pattern.permute.xlu0 0
    %441 = vperm.xlu0 %440, %v393
    %v442 = vpop.permute.xlu0 %441
    %v443 = vlaneseq
    %v444 = vshrl.u32 %v443, 7
    %v445 = vsub.s32 0, %v444
    %v446 = vrot.slane %v394, %v445
    %vm447 = vcmp.eq.s32.totalorder %v397, %v446
    %vm448 = vcmp.eq.s32.totalorder %v400, %v446
    %vm449 = vcmp.eq.s32.totalorder %v403, %v446
    %vm450 = vcmp.eq.s32.totalorder %v406, %v446
    %vm451 = vcmp.eq.s32.totalorder %v409, %v446
    %vm452 = vcmp.eq.s32.totalorder %v412, %v446
    %vm453 = vcmp.eq.s32.totalorder %v415, %v446
    %vm454 = vcmp.eq.s32.totalorder %v418, %v446
    %vm455 = vcmp.eq.s32.totalorder %v421, %v446
    %vm456 = vcmp.eq.s32.totalorder %v424, %v446
    %vm457 = vcmp.eq.s32.totalorder %v427, %v446
    %vm458 = vcmp.eq.s32.totalorder %v430, %v446
    %vm459 = vcmp.eq.s32.totalorder %v433, %v446
    %vm460 = vcmp.eq.s32.totalorder %v436, %v446
    %vm461 = vcmp.eq.s32.totalorder %v439, %v446
    %vm462 = vcmp.eq.s32.totalorder %v442, %v446
    %vm463 = vmand %vm447, %vm362
    %vm464 = vmand %vm448, %vm363
    %vm465 = vmand %vm449, %vm364
    %vm466 = vmand %vm450, %vm365
    %vm467 = vmand %vm451, %vm366
    %vm468 = vmand %vm452, %vm367
    %vm469 = vmand %vm453, %vm368
    %vm470 = vmand %vm454, %vm369
    %vm471 = vmand %vm455, %vm370
    %vm472 = vmand %vm456, %vm371
    %vm473 = vmand %vm457, %vm372
    %vm474 = vmand %vm458, %vm373
    %vm475 = vmand %vm459, %vm374
    %vm476 = vmand %vm460, %vm375
    %vm477 = vmand %vm461, %vm376
    %vm478 = vmand %vm462, %vm377
    %v479 = vsel %vm463, 1, 0
    %v480 = vsel %vm464, 1, 0
    %v481 = vsel %vm465, 1, 0
    %v482 = vsel %vm466, 1, 0
    %v483 = vsel %vm467, 1, 0
    %v484 = vsel %vm468, 1, 0
    %v485 = vsel %vm469, 1, 0
    %v486 = vsel %vm470, 1, 0
    %v487 = vsel %vm471, 1, 0
    %v488 = vsel %vm472, 1, 0
    %v489 = vsel %vm473, 1, 0
    %v490 = vsel %vm474, 1, 0
    %v491 = vsel %vm475, 1, 0
    %v492 = vsel %vm476, 1, 0
    %v493 = vsel %vm477, 1, 0
    %v494 = vsel %vm478, 1, 0
    %v495 = vcvt.s32.f32 %v479
    %v496 = vcvt.s32.f32 %v480
    %v497 = vcvt.s32.f32 %v481
    %v498 = vcvt.s32.f32 %v482
    %v499 = vcvt.s32.f32 %v483
    %v500 = vcvt.s32.f32 %v484
    %v501 = vcvt.s32.f32 %v485
    %v502 = vcvt.s32.f32 %v486
    %v503 = vcvt.s32.f32 %v487
    %v504 = vcvt.s32.f32 %v488
    %v505 = vcvt.s32.f32 %v489
    %v506 = vcvt.s32.f32 %v490
    %v507 = vcvt.s32.f32 %v491
    %v508 = vcvt.s32.f32 %v492
    %v509 = vcvt.s32.f32 %v493
    %v510 = vcvt.s32.f32 %v494
    %v511 = vsel %vm345, %v243, -1e+30
    %v512 = vsel %vm345, %v246, -1e+30
    %v513 = vsel %vm345, %v251, -1e+30
    %v514 = vsel %vm345, %v254, -1e+30
    %v515 = vsel %vm345, %v259, -1e+30
    %v516 = vsel %vm345, %v262, -1e+30
    %v517 = vsel %vm345, %v267, -1e+30
    %v518 = vsel %vm345, %v270, -1e+30
    %v519 = vsel %vm345, %v275, -1e+30
    %v520 = vsel %vm345, %v278, -1e+30
    %v521 = vsel %vm345, %v283, -1e+30
    %v522 = vsel %vm345, %v286, -1e+30
    %v523 = vsel %vm345, %v291, -1e+30
    %v524 = vsel %vm345, %v294, -1e+30
    %v525 = vsel %vm345, %v299, -1e+30
    %v526 = vsel %vm345, %v302, -1e+30
    %v527 = vld [vmem:[#allocation2] sm:$0xff]
    %v528 = vld [vmem:[#allocation2 + $0x8] sm:$0xff]
    %v529 = vld [vmem:[#allocation2 + $0x10] sm:$0xff]
    %v530 = vld [vmem:[#allocation2 + $0x18] sm:$0xff]
    %v531 = vld [vmem:[#allocation2 + $0x20] sm:$0xff]
    %v532 = vld [vmem:[#allocation2 + $0x28] sm:$0xff]
    %v533 = vld [vmem:[#allocation2 + $0x30] sm:$0xff]
    %v534 = vld [vmem:[#allocation2 + $0x38] sm:$0xff]
    %v535 = vld [vmem:[#allocation2 + $0x40] sm:$0xff]
    %v536 = vld [vmem:[#allocation2 + $0x48] sm:$0xff]
    %v537 = vld [vmem:[#allocation2 + $0x50] sm:$0xff]
    %v538 = vld [vmem:[#allocation2 + $0x58] sm:$0xff]
    %v539 = vld [vmem:[#allocation2 + $0x60] sm:$0xff]
    %v540 = vld [vmem:[#allocation2 + $0x68] sm:$0xff]
    %v541 = vld [vmem:[#allocation2 + $0x70] sm:$0xff]
    %v542 = vld [vmem:[#allocation2 + $0x78] sm:$0xff]
    %543 = vmax.xlane.f32.xlu0 %v511
    %v544 = vpop.xlane.xlu0 %543
    %545 = vmax.xlane.f32.xlu0 %v512
    %v546 = vpop.xlane.xlu0 %545
    %547 = vmax.xlane.f32.xlu0 %v513
    %v548 = vpop.xlane.xlu0 %547
    %549 = vmax.xlane.f32.xlu0 %v514
    %v550 = vpop.xlane.xlu0 %549
    %551 = vmax.xlane.f32.xlu0 %v515
    %v552 = vpop.xlane.xlu0 %551
    %553 = vmax.xlane.f32.xlu0 %v516
    %v554 = vpop.xlane.xlu0 %553
    %555 = vmax.xlane.f32.xlu0 %v517
    %v556 = vpop.xlane.xlu0 %555
    %557 = vmax.xlane.f32.xlu0 %v518
    %v558 = vpop.xlane.xlu0 %557
    %559 = vmax.xlane.f32.xlu0 %v519
    %v560 = vpop.xlane.xlu0 %559
    %561 = vmax.xlane.f32.xlu0 %v520
    %v562 = vpop.xlane.xlu0 %561
    %563 = vmax.xlane.f32.xlu0 %v521
    %v564 = vpop.xlane.xlu0 %563
    %565 = vmax.xlane.f32.xlu0 %v522
    %v566 = vpop.xlane.xlu0 %565
    %567 = vmax.xlane.f32.xlu0 %v523
    %v568 = vpop.xlane.xlu0 %567
    %569 = vmax.xlane.f32.xlu0 %v524
    %v570 = vpop.xlane.xlu0 %569
    %571 = vmax.xlane.f32.xlu0 %v525
    %v572 = vpop.xlane.xlu0 %571
    %573 = vmax.xlane.f32.xlu0 %v526
    %v574 = vpop.xlane.xlu0 %573
    %v575 = vmax.f32 %v527, %v544
    %v576 = vmax.f32 %v528, %v546
    %v577 = vmax.f32 %v529, %v548
    %v578 = vmax.f32 %v530, %v550
    %v579 = vmax.f32 %v531, %v552
    %v580 = vmax.f32 %v532, %v554
    %v581 = vmax.f32 %v533, %v556
    %v582 = vmax.f32 %v534, %v558
    %v583 = vmax.f32 %v535, %v560
    %v584 = vmax.f32 %v536, %v562
    %v585 = vmax.f32 %v537, %v564
    %v586 = vmax.f32 %v538, %v566
    %v587 = vmax.f32 %v539, %v568
    %v588 = vmax.f32 %v540, %v570
    %v589 = vmax.f32 %v541, %v572
    %v590 = vmax.f32 %v542, %v574
    %v591 = vsub.f32 %v527, %v575
    %v592 = vsub.f32 %v528, %v576
    %v593 = vsub.f32 %v529, %v577
    %v594 = vsub.f32 %v530, %v578
    %v595 = vsub.f32 %v531, %v579
    %v596 = vsub.f32 %v532, %v580
    %v597 = vsub.f32 %v533, %v581
    %v598 = vsub.f32 %v534, %v582
    %v599 = vsub.f32 %v535, %v583
    %v600 = vsub.f32 %v536, %v584
    %v601 = vsub.f32 %v537, %v585
    %v602 = vsub.f32 %v538, %v586
    %v603 = vsub.f32 %v539, %v587
    %v604 = vsub.f32 %v540, %v588
    %v605 = vsub.f32 %v541, %v589
    %v606 = vsub.f32 %v542, %v590
    %v607 = vmul.f32 %v591, 1.442695
    %v608 = vpow.pop %v607
    %v609 = vmul.f32 %v592, 1.442695
    %v610 = vpow.pop %v609
    %v611 = vmul.f32 %v593, 1.442695
    %v612 = vpow.pop %v611
    %v613 = vmul.f32 %v594, 1.442695
    %v614 = vpow.pop %v613
    %v615 = vmul.f32 %v595, 1.442695
    %v616 = vpow.pop %v615
    %v617 = vmul.f32 %v596, 1.442695
    %v618 = vpow.pop %v617
    %v619 = vmul.f32 %v597, 1.442695
    %v620 = vpow.pop %v619
    %v621 = vmul.f32 %v598, 1.442695
    %v622 = vpow.pop %v621
    %v623 = vmul.f32 %v599, 1.442695
    %v624 = vpow.pop %v623
    %v625 = vmul.f32 %v600, 1.442695
    %v626 = vpow.pop %v625
    %v627 = vmul.f32 %v601, 1.442695
    %v628 = vpow.pop %v627
    %v629 = vmul.f32 %v602, 1.442695
    %v630 = vpow.pop %v629
    %v631 = vmul.f32 %v603, 1.442695
    %v632 = vpow.pop %v631
    %v633 = vmul.f32 %v604, 1.442695
    %v634 = vpow.pop %v633
    %v635 = vmul.f32 %v605, 1.442695
    %v636 = vpow.pop %v635
    %v637 = vmul.f32 %v606, 1.442695
    %v638 = vpow.pop %v637
    %640 = vset.pattern.permute.xlu0 0
    %641 = vperm.xlu0 %640, %v575
    %v642 = vpop.permute.xlu0 %641
    %645 = vset.pattern.permute.xlu0 0
    %646 = vperm.xlu0 %645, %v576
    %v647 = vpop.permute.xlu0 %646
    %650 = vset.pattern.permute.xlu0 0
    %651 = vperm.xlu0 %650, %v577
    %v652 = vpop.permute.xlu0 %651
    %655 = vset.pattern.permute.xlu0 0
    %656 = vperm.xlu0 %655, %v578
    %v657 = vpop.permute.xlu0 %656
    %660 = vset.pattern.permute.xlu0 0
    %661 = vperm.xlu0 %660, %v579
    %v662 = vpop.permute.xlu0 %661
    %665 = vset.pattern.permute.xlu0 0
    %666 = vperm.xlu0 %665, %v580
    %v667 = vpop.permute.xlu0 %666
    %670 = vset.pattern.permute.xlu0 0
    %671 = vperm.xlu0 %670, %v581
    %v672 = vpop.permute.xlu0 %671
    %675 = vset.pattern.permute.xlu0 0
    %676 = vperm.xlu0 %675, %v582
    %v677 = vpop.permute.xlu0 %676
    %680 = vset.pattern.permute.xlu0 0
    %681 = vperm.xlu0 %680, %v583
    %v682 = vpop.permute.xlu0 %681
    %685 = vset.pattern.permute.xlu0 0
    %686 = vperm.xlu0 %685, %v584
    %v687 = vpop.permute.xlu0 %686
    %690 = vset.pattern.permute.xlu0 0
    %691 = vperm.xlu0 %690, %v585
    %v692 = vpop.permute.xlu0 %691
    %695 = vset.pattern.permute.xlu0 0
    %696 = vperm.xlu0 %695, %v586
    %v697 = vpop.permute.xlu0 %696
    %700 = vset.pattern.permute.xlu0 0
    %701 = vperm.xlu0 %700, %v587
    %v702 = vpop.permute.xlu0 %701
    %705 = vset.pattern.permute.xlu0 0
    %706 = vperm.xlu0 %705, %v588
    %v707 = vpop.permute.xlu0 %706
    %710 = vset.pattern.permute.xlu0 0
    %711 = vperm.xlu0 %710, %v589
    %v712 = vpop.permute.xlu0 %711
    %715 = vset.pattern.permute.xlu0 0
    %716 = vperm.xlu0 %715, %v590
    %v717 = vpop.permute.xlu0 %716
    %v719 = vsub.f32 %v511, %v642
    %v720 = vsub.f32 %v512, %v647
    %v721 = vsub.f32 %v513, %v652
    %v722 = vsub.f32 %v514, %v657
    %v723 = vsub.f32 %v515, %v662
    %v724 = vsub.f32 %v516, %v667
    %v725 = vsub.f32 %v517, %v672
    %v726 = vsub.f32 %v518, %v677
    %v727 = vsub.f32 %v519, %v682
    %v728 = vsub.f32 %v520, %v687
    %v729 = vsub.f32 %v521, %v692
    %v730 = vsub.f32 %v522, %v697
    %v731 = vsub.f32 %v523, %v702
    %v732 = vsub.f32 %v524, %v707
    %v733 = vsub.f32 %v525, %v712
    %v734 = vsub.f32 %v526, %v717
    %v735 = vmul.f32 %v719, 1.442695
    %v736 = vpow.pop %v735
    %v737 = vmul.f32 %v720, 1.442695
    %v738 = vpow.pop %v737
    %v739 = vmul.f32 %v721, 1.442695
    %v740 = vpow.pop %v739
    %v741 = vmul.f32 %v722, 1.442695
    %v742 = vpow.pop %v741
    %v743 = vmul.f32 %v723, 1.442695
    %v744 = vpow.pop %v743
    %v745 = vmul.f32 %v724, 1.442695
    %v746 = vpow.pop %v745
    %v747 = vmul.f32 %v725, 1.442695
    %v748 = vpow.pop %v747
    %v749 = vmul.f32 %v726, 1.442695
    %v750 = vpow.pop %v749
    %v751 = vmul.f32 %v727, 1.442695
    %v752 = vpow.pop %v751
    %v753 = vmul.f32 %v728, 1.442695
    %v754 = vpow.pop %v753
    %v755 = vmul.f32 %v729, 1.442695
    %v756 = vpow.pop %v755
    %v757 = vmul.f32 %v730, 1.442695
    %v758 = vpow.pop %v757
    %v759 = vmul.f32 %v731, 1.442695
    %v760 = vpow.pop %v759
    %v761 = vmul.f32 %v732, 1.442695
    %v762 = vpow.pop %v761
    %v763 = vmul.f32 %v733, 1.442695
    %v764 = vpow.pop %v763
    %v765 = vmul.f32 %v734, 1.442695
    %v766 = vpow.pop %v765
    %v767 = vsel %vm362, %v736, 0.0
    %v768 = vsel %vm363, %v738, 0.0
    %v769 = vsel %vm364, %v740, 0.0
    %v770 = vsel %vm365, %v742, 0.0
    %v771 = vsel %vm366, %v744, 0.0
    %v772 = vsel %vm367, %v746, 0.0
    %v773 = vsel %vm368, %v748, 0.0
    %v774 = vsel %vm369, %v750, 0.0
    %v775 = vsel %vm370, %v752, 0.0
    %v776 = vsel %vm371, %v754, 0.0
    %v777 = vsel %vm372, %v756, 0.0
    %v778 = vsel %vm373, %v758, 0.0
    %v779 = vsel %vm374, %v760, 0.0
    %v780 = vsel %vm375, %v762, 0.0
    %v781 = vsel %vm376, %v764, 0.0
    %v782 = vsel %vm377, %v766, 0.0
    %v783 = vld [vmem:[#allocation3] sm:$0xff]
    %v784 = vld [vmem:[#allocation3 + $0x8] sm:$0xff]
    %v785 = vld [vmem:[#allocation3 + $0x10] sm:$0xff]
    %v786 = vld [vmem:[#allocation3 + $0x18] sm:$0xff]
    %v787 = vld [vmem:[#allocation3 + $0x20] sm:$0xff]
    %v788 = vld [vmem:[#allocation3 + $0x28] sm:$0xff]
    %v789 = vld [vmem:[#allocation3 + $0x30] sm:$0xff]
    %v790 = vld [vmem:[#allocation3 + $0x38] sm:$0xff]
    %v791 = vld [vmem:[#allocation3 + $0x40] sm:$0xff]
    %v792 = vld [vmem:[#allocation3 + $0x48] sm:$0xff]
    %v793 = vld [vmem:[#allocation3 + $0x50] sm:$0xff]
    %v794 = vld [vmem:[#allocation3 + $0x58] sm:$0xff]
    %v795 = vld [vmem:[#allocation3 + $0x60] sm:$0xff]
    %v796 = vld [vmem:[#allocation3 + $0x68] sm:$0xff]
    %v797 = vld [vmem:[#allocation3 + $0x70] sm:$0xff]
    %v798 = vld [vmem:[#allocation3 + $0x78] sm:$0xff]
    %v799 = vmul.f32 %v608, %v783
    %v800 = vmul.f32 %v610, %v784
    %v801 = vmul.f32 %v612, %v785
    %v802 = vmul.f32 %v614, %v786
    %v803 = vmul.f32 %v616, %v787
    %v804 = vmul.f32 %v618, %v788
    %v805 = vmul.f32 %v620, %v789
    %v806 = vmul.f32 %v622, %v790
    %v807 = vmul.f32 %v624, %v791
    %v808 = vmul.f32 %v626, %v792
    %v809 = vmul.f32 %v628, %v793
    %v810 = vmul.f32 %v630, %v794
    %v811 = vmul.f32 %v632, %v795
    %v812 = vmul.f32 %v634, %v796
    %v813 = vmul.f32 %v636, %v797
    %v814 = vmul.f32 %v638, %v798
    %815 = vadd.xlane.f32.xlu0 %v767
    %v816 = vpop.xlane.xlu0 %815
    %817 = vadd.xlane.f32.xlu0 %v768
    %v818 = vpop.xlane.xlu0 %817
    %819 = vadd.xlane.f32.xlu0 %v769
    %v820 = vpop.xlane.xlu0 %819
    %821 = vadd.xlane.f32.xlu0 %v770
    %v822 = vpop.xlane.xlu0 %821
    %823 = vadd.xlane.f32.xlu0 %v771
    %v824 = vpop.xlane.xlu0 %823
    %825 = vadd.xlane.f32.xlu0 %v772
    %v826 = vpop.xlane.xlu0 %825
    %827 = vadd.xlane.f32.xlu0 %v773
    %v828 = vpop.xlane.xlu0 %827
    %829 = vadd.xlane.f32.xlu0 %v774
    %v830 = vpop.xlane.xlu0 %829
    %831 = vadd.xlane.f32.xlu0 %v775
    %v832 = vpop.xlane.xlu0 %831
    %833 = vadd.xlane.f32.xlu0 %v776
    %v834 = vpop.xlane.xlu0 %833
    %835 = vadd.xlane.f32.xlu0 %v777
    %v836 = vpop.xlane.xlu0 %835
    %837 = vadd.xlane.f32.xlu0 %v778
    %v838 = vpop.xlane.xlu0 %837
    %839 = vadd.xlane.f32.xlu0 %v779
    %v840 = vpop.xlane.xlu0 %839
    %841 = vadd.xlane.f32.xlu0 %v780
    %v842 = vpop.xlane.xlu0 %841
    %843 = vadd.xlane.f32.xlu0 %v781
    %v844 = vpop.xlane.xlu0 %843
    %845 = vadd.xlane.f32.xlu0 %v782
    %v846 = vpop.xlane.xlu0 %845
    %v847 = vadd.f32 %v799, %v816
    %v848 = vadd.f32 %v800, %v818
    %v849 = vadd.f32 %v801, %v820
    %v850 = vadd.f32 %v802, %v822
    %v851 = vadd.f32 %v803, %v824
    %v852 = vadd.f32 %v804, %v826
    %v853 = vadd.f32 %v805, %v828
    %v854 = vadd.f32 %v806, %v830
    %v855 = vadd.f32 %v807, %v832
    %v856 = vadd.f32 %v808, %v834
    %v857 = vadd.f32 %v809, %v836
    %v858 = vadd.f32 %v810, %v838
    %v859 = vadd.f32 %v811, %v840
    %v860 = vadd.f32 %v812, %v842
    %v861 = vadd.f32 %v813, %v844
    %v862 = vadd.f32 %v814, %v846
    %vm863 = vcmask 7168
    %864 = vst.msk [vmem:[#allocation3] sm:$0xff] %vm863, %v847
    %865 = vst.msk [vmem:[#allocation3 + $0x8] sm:$0xff] %vm863, %v848
    %866 = vst.msk [vmem:[#allocation3 + $0x10] sm:$0xff] %vm863, %v849
    %867 = vst.msk [vmem:[#allocation3 + $0x18] sm:$0xff] %vm863, %v850
    %868 = vst.msk [vmem:[#allocation3 + $0x20] sm:$0xff] %vm863, %v851
    %869 = vst.msk [vmem:[#allocation3 + $0x28] sm:$0xff] %vm863, %v852
    %870 = vst.msk [vmem:[#allocation3 + $0x30] sm:$0xff] %vm863, %v853
    %871 = vst.msk [vmem:[#allocation3 + $0x38] sm:$0xff] %vm863, %v854
    %872 = vst.msk [vmem:[#allocation3 + $0x40] sm:$0xff] %vm863, %v855
    %873 = vst.msk [vmem:[#allocation3 + $0x48] sm:$0xff] %vm863, %v856
    %874 = vst.msk [vmem:[#allocation3 + $0x50] sm:$0xff] %vm863, %v857
    %875 = vst.msk [vmem:[#allocation3 + $0x58] sm:$0xff] %vm863, %v858
    %876 = vst.msk [vmem:[#allocation3 + $0x60] sm:$0xff] %vm863, %v859
    %877 = vst.msk [vmem:[#allocation3 + $0x68] sm:$0xff] %vm863, %v860
    %878 = vst.msk [vmem:[#allocation3 + $0x70] sm:$0xff] %vm863, %v861
    %879 = vst.msk [vmem:[#allocation3 + $0x78] sm:$0xff] %vm863, %v862
    %v880 = vld [vmem:[#allocation4] sm:$0xff]
    %v881 = vld [vmem:[#allocation4 + $0x8] sm:$0xff]
    %v882 = vld [vmem:[#allocation4 + $0x10] sm:$0xff]
    %v883 = vld [vmem:[#allocation4 + $0x18] sm:$0xff]
    %v884 = vld [vmem:[#allocation4 + $0x20] sm:$0xff]
    %v885 = vld [vmem:[#allocation4 + $0x28] sm:$0xff]
    %v886 = vld [vmem:[#allocation4 + $0x30] sm:$0xff]
    %v887 = vld [vmem:[#allocation4 + $0x38] sm:$0xff]
    %v888 = vld [vmem:[#allocation4 + $0x40] sm:$0xff]
    %v889 = vld [vmem:[#allocation4 + $0x48] sm:$0xff]
    %v890 = vld [vmem:[#allocation4 + $0x50] sm:$0xff]
    %v891 = vld [vmem:[#allocation4 + $0x58] sm:$0xff]
    %v892 = vld [vmem:[#allocation4 + $0x60] sm:$0xff]
    %v893 = vld [vmem:[#allocation4 + $0x68] sm:$0xff]
    %v894 = vld [vmem:[#allocation4 + $0x70] sm:$0xff]
    %v895 = vld [vmem:[#allocation4 + $0x78] sm:$0xff]
    %v896 = vmul.f32 %v495, %v243
    %v897 = vmul.f32 %v496, %v246
    %v898 = vmul.f32 %v497, %v251
    %v899 = vmul.f32 %v498, %v254
    %v900 = vmul.f32 %v499, %v259
    %v901 = vmul.f32 %v500, %v262
    %v902 = vmul.f32 %v501, %v267
    %v903 = vmul.f32 %v502, %v270
    %v904 = vmul.f32 %v503, %v275
    %v905 = vmul.f32 %v504, %v278
    %v906 = vmul.f32 %v505, %v283
    %v907 = vmul.f32 %v506, %v286
    %v908 = vmul.f32 %v507, %v291
    %v909 = vmul.f32 %v508, %v294
    %v910 = vmul.f32 %v509, %v299
    %v911 = vmul.f32 %v510, %v302
    %912 = vadd.xlane.f32.xlu0 %v896
    %v913 = vpop.xlane.xlu0 %912
    %914 = vadd.xlane.f32.xlu0 %v897
    %v915 = vpop.xlane.xlu0 %914
    %916 = vadd.xlane.f32.xlu0 %v898
    %v917 = vpop.xlane.xlu0 %916
    %918 = vadd.xlane.f32.xlu0 %v899
    %v919 = vpop.xlane.xlu0 %918
    %920 = vadd.xlane.f32.xlu0 %v900
    %v921 = vpop.xlane.xlu0 %920
    %922 = vadd.xlane.f32.xlu0 %v901
    %v923 = vpop.xlane.xlu0 %922
    %924 = vadd.xlane.f32.xlu0 %v902
    %v925 = vpop.xlane.xlu0 %924
    %926 = vadd.xlane.f32.xlu0 %v903
    %v927 = vpop.xlane.xlu0 %926
    %928 = vadd.xlane.f32.xlu0 %v904
    %v929 = vpop.xlane.xlu0 %928
    %930 = vadd.xlane.f32.xlu0 %v905
    %v931 = vpop.xlane.xlu0 %930
    %932 = vadd.xlane.f32.xlu0 %v906
    %v933 = vpop.xlane.xlu0 %932
    %934 = vadd.xlane.f32.xlu0 %v907
    %v935 = vpop.xlane.xlu0 %934
    %936 = vadd.xlane.f32.xlu0 %v908
    %v937 = vpop.xlane.xlu0 %936
    %938 = vadd.xlane.f32.xlu0 %v909
    %v939 = vpop.xlane.xlu0 %938
    %940 = vadd.xlane.f32.xlu0 %v910
    %v941 = vpop.xlane.xlu0 %940
    %942 = vadd.xlane.f32.xlu0 %v911
    %v943 = vpop.xlane.xlu0 %942
    %v944 = vadd.f32 %v880, %v913
    %v945 = vadd.f32 %v881, %v915
    %v946 = vadd.f32 %v882, %v917
    %v947 = vadd.f32 %v883, %v919
    %v948 = vadd.f32 %v884, %v921
    %v949 = vadd.f32 %v885, %v923
    %v950 = vadd.f32 %v886, %v925
    %v951 = vadd.f32 %v887, %v927
    %v952 = vadd.f32 %v888, %v929
    %v953 = vadd.f32 %v889, %v931
    %v954 = vadd.f32 %v890, %v933
    %v955 = vadd.f32 %v891, %v935
    %v956 = vadd.f32 %v892, %v937
    %v957 = vadd.f32 %v893, %v939
    %v958 = vadd.f32 %v894, %v941
    %v959 = vadd.f32 %v895, %v943
    %960 = vst.msk [vmem:[#allocation4] sm:$0xff] %vm863, %v944
    %961 = vst.msk [vmem:[#allocation4 + $0x8] sm:$0xff] %vm863, %v945
    %962 = vst.msk [vmem:[#allocation4 + $0x10] sm:$0xff] %vm863, %v946
    %963 = vst.msk [vmem:[#allocation4 + $0x18] sm:$0xff] %vm863, %v947
    %964 = vst.msk [vmem:[#allocation4 + $0x20] sm:$0xff] %vm863, %v948
    %965 = vst.msk [vmem:[#allocation4 + $0x28] sm:$0xff] %vm863, %v949
    %966 = vst.msk [vmem:[#allocation4 + $0x30] sm:$0xff] %vm863, %v950
    %967 = vst.msk [vmem:[#allocation4 + $0x38] sm:$0xff] %vm863, %v951
    %968 = vst.msk [vmem:[#allocation4 + $0x40] sm:$0xff] %vm863, %v952
    %969 = vst.msk [vmem:[#allocation4 + $0x48] sm:$0xff] %vm863, %v953
    %970 = vst.msk [vmem:[#allocation4 + $0x50] sm:$0xff] %vm863, %v954
    %971 = vst.msk [vmem:[#allocation4 + $0x58] sm:$0xff] %vm863, %v955
    %972 = vst.msk [vmem:[#allocation4 + $0x60] sm:$0xff] %vm863, %v956
    %973 = vst.msk [vmem:[#allocation4 + $0x68] sm:$0xff] %vm863, %v957
    %974 = vst.msk [vmem:[#allocation4 + $0x70] sm:$0xff] %vm863, %v958
    %975 = vst.msk [vmem:[#allocation4 + $0x78] sm:$0xff] %vm863, %v959
    %v976 = vld [vmem:[#allocation5] sm:$0xff]
    %v977 = vld [vmem:[#allocation5 + $0x8] sm:$0xff]
    %v978 = vld [vmem:[#allocation5 + $0x10] sm:$0xff]
    %v979 = vld [vmem:[#allocation5 + $0x18] sm:$0xff]
    %v980 = vld [vmem:[#allocation5 + $0x20] sm:$0xff]
    %v981 = vld [vmem:[#allocation5 + $0x28] sm:$0xff]
    %v982 = vld [vmem:[#allocation5 + $0x30] sm:$0xff]
    %v983 = vld [vmem:[#allocation5 + $0x38] sm:$0xff]
    %v984 = vld [vmem:[#allocation5 + $0x40] sm:$0xff]
    %v985 = vld [vmem:[#allocation5 + $0x48] sm:$0xff]
    %v986 = vld [vmem:[#allocation5 + $0x50] sm:$0xff]
    %v987 = vld [vmem:[#allocation5 + $0x58] sm:$0xff]
    %v988 = vld [vmem:[#allocation5 + $0x60] sm:$0xff]
    %v989 = vld [vmem:[#allocation5 + $0x68] sm:$0xff]
    %v990 = vld [vmem:[#allocation5 + $0x70] sm:$0xff]
    %v991 = vld [vmem:[#allocation5 + $0x78] sm:$0xff]
    %992 = vadd.xlane.f32.xlu0 %v495
    %v993 = vpop.xlane.xlu0 %992
    %994 = vadd.xlane.f32.xlu0 %v496
    %v995 = vpop.xlane.xlu0 %994
    %996 = vadd.xlane.f32.xlu0 %v497
    %v997 = vpop.xlane.xlu0 %996
    %998 = vadd.xlane.f32.xlu0 %v498
    %v999 = vpop.xlane.xlu0 %998
    %1000 = vadd.xlane.f32.xlu0 %v499
    %v1001 = vpop.xlane.xlu0 %1000
    %1002 = vadd.xlane.f32.xlu0 %v500
    %v1003 = vpop.xlane.xlu0 %1002
    %1004 = vadd.xlane.f32.xlu0 %v501
    %v1005 = vpop.xlane.xlu0 %1004
    %1006 = vadd.xlane.f32.xlu0 %v502
    %v1007 = vpop.xlane.xlu0 %1006
    %1008 = vadd.xlane.f32.xlu0 %v503
    %v1009 = vpop.xlane.xlu0 %1008
    %1010 = vadd.xlane.f32.xlu0 %v504
    %v1011 = vpop.xlane.xlu0 %1010
    %1012 = vadd.xlane.f32.xlu0 %v505
    %v1013 = vpop.xlane.xlu0 %1012
    %1014 = vadd.xlane.f32.xlu0 %v506
    %v1015 = vpop.xlane.xlu0 %1014
    %1016 = vadd.xlane.f32.xlu0 %v507
    %v1017 = vpop.xlane.xlu0 %1016
    %1018 = vadd.xlane.f32.xlu0 %v508
    %v1019 = vpop.xlane.xlu0 %1018
    %1020 = vadd.xlane.f32.xlu0 %v509
    %v1021 = vpop.xlane.xlu0 %1020
    %1022 = vadd.xlane.f32.xlu0 %v510
    %v1023 = vpop.xlane.xlu0 %1022
    %v1024 = vadd.f32 %v976, %v993
    %v1025 = vadd.f32 %v977, %v995
    %v1026 = vadd.f32 %v978, %v997
    %v1027 = vadd.f32 %v979, %v999
    %v1028 = vadd.f32 %v980, %v1001
    %v1029 = vadd.f32 %v981, %v1003
    %v1030 = vadd.f32 %v982, %v1005
    %v1031 = vadd.f32 %v983, %v1007
    %v1032 = vadd.f32 %v984, %v1009
    %v1033 = vadd.f32 %v985, %v1011
    %v1034 = vadd.f32 %v986, %v1013
    %v1035 = vadd.f32 %v987, %v1015
    %v1036 = vadd.f32 %v988, %v1017
    %v1037 = vadd.f32 %v989, %v1019
    %v1038 = vadd.f32 %v990, %v1021
    %v1039 = vadd.f32 %v991, %v1023
    %1040 = vst.msk [vmem:[#allocation5] sm:$0xff] %vm863, %v1024
    %1041 = vst.msk [vmem:[#allocation5 + $0x8] sm:$0xff] %vm863, %v1025
    %1042 = vst.msk [vmem:[#allocation5 + $0x10] sm:$0xff] %vm863, %v1026
    %1043 = vst.msk [vmem:[#allocation5 + $0x18] sm:$0xff] %vm863, %v1027
    %1044 = vst.msk [vmem:[#allocation5 + $0x20] sm:$0xff] %vm863, %v1028
    %1045 = vst.msk [vmem:[#allocation5 + $0x28] sm:$0xff] %vm863, %v1029
    %1046 = vst.msk [vmem:[#allocation5 + $0x30] sm:$0xff] %vm863, %v1030
    %1047 = vst.msk [vmem:[#allocation5 + $0x38] sm:$0xff] %vm863, %v1031
    %1048 = vst.msk [vmem:[#allocation5 + $0x40] sm:$0xff] %vm863, %v1032
    %1049 = vst.msk [vmem:[#allocation5 + $0x48] sm:$0xff] %vm863, %v1033
    %1050 = vst.msk [vmem:[#allocation5 + $0x50] sm:$0xff] %vm863, %v1034
    %1051 = vst.msk [vmem:[#allocation5 + $0x58] sm:$0xff] %vm863, %v1035
    %1052 = vst.msk [vmem:[#allocation5 + $0x60] sm:$0xff] %vm863, %v1036
    %1053 = vst.msk [vmem:[#allocation5 + $0x68] sm:$0xff] %vm863, %v1037
    %1054 = vst.msk [vmem:[#allocation5 + $0x70] sm:$0xff] %vm863, %v1038
    %1055 = vst.msk [vmem:[#allocation5 + $0x78] sm:$0xff] %vm863, %v1039
    %1056 = vst.msk [vmem:[#allocation2] sm:$0xff] %vm863, %v575
    %1057 = vst.msk [vmem:[#allocation2 + $0x8] sm:$0xff] %vm863, %v576
    %1058 = vst.msk [vmem:[#allocation2 + $0x10] sm:$0xff] %vm863, %v577
    %1059 = vst.msk [vmem:[#allocation2 + $0x18] sm:$0xff] %vm863, %v578
    %1060 = vst.msk [vmem:[#allocation2 + $0x20] sm:$0xff] %vm863, %v579
    %1061 = vst.msk [vmem:[#allocation2 + $0x28] sm:$0xff] %vm863, %v580
    %1062 = vst.msk [vmem:[#allocation2 + $0x30] sm:$0xff] %vm863, %v581
    %1063 = vst.msk [vmem:[#allocation2 + $0x38] sm:$0xff] %vm863, %v582
    %1064 = vst.msk [vmem:[#allocation2 + $0x40] sm:$0xff] %vm863, %v583
    %1065 = vst.msk [vmem:[#allocation2 + $0x48] sm:$0xff] %vm863, %v584
    %1066 = vst.msk [vmem:[#allocation2 + $0x50] sm:$0xff] %vm863, %v585
    %1067 = vst.msk [vmem:[#allocation2 + $0x58] sm:$0xff] %vm863, %v586
    %1068 = vst.msk [vmem:[#allocation2 + $0x60] sm:$0xff] %vm863, %v587
    %1069 = vst.msk [vmem:[#allocation2 + $0x68] sm:$0xff] %vm863, %v588
    %1070 = vst.msk [vmem:[#allocation2 + $0x70] sm:$0xff] %vm863, %v589
    %1071 = vst.msk [vmem:[#allocation2 + $0x78] sm:$0xff] %vm863, %v590
    // Predicated region
    $region22: #{tpu_custom_call.1} parent=1 // pred_check
      %p1072 = pneg %p19
    $region23: #{tpu_custom_call.1} parent=1 // pred_check_branch
      %1074 = sbr.rel (%p1072) target = $region25
    $region24: #{tpu_custom_call.1} parent=1 // pred_region
      %v1075 = vld [vmem:[#allocation2] sm:$0xff]
      %v1076 = vld [vmem:[#allocation2 + $0x8] sm:$0xff]
      %v1077 = vld [vmem:[#allocation2 + $0x10] sm:$0xff]
      %v1078 = vld [vmem:[#allocation2 + $0x18] sm:$0xff]
      %v1079 = vld [vmem:[#allocation2 + $0x20] sm:$0xff]
      %v1080 = vld [vmem:[#allocation2 + $0x28] sm:$0xff]
      %v1081 = vld [vmem:[#allocation2 + $0x30] sm:$0xff]
      %v1082 = vld [vmem:[#allocation2 + $0x38] sm:$0xff]
      %v1083 = vld [vmem:[#allocation2 + $0x40] sm:$0xff]
      %v1084 = vld [vmem:[#allocation2 + $0x48] sm:$0xff]
      %v1085 = vld [vmem:[#allocation2 + $0x50] sm:$0xff]
      %v1086 = vld [vmem:[#allocation2 + $0x58] sm:$0xff]
      %v1087 = vld [vmem:[#allocation2 + $0x60] sm:$0xff]
      %v1088 = vld [vmem:[#allocation2 + $0x68] sm:$0xff]
      %v1089 = vld [vmem:[#allocation2 + $0x70] sm:$0xff]
      %v1090 = vld [vmem:[#allocation2 + $0x78] sm:$0xff]
      %v1091 = vld [vmem:[#allocation3] sm:$0xff]
      %v1092 = vld [vmem:[#allocation3 + $0x8] sm:$0xff]
      %v1093 = vld [vmem:[#allocation3 + $0x10] sm:$0xff]
      %v1094 = vld [vmem:[#allocation3 + $0x18] sm:$0xff]
      %v1095 = vld [vmem:[#allocation3 + $0x20] sm:$0xff]
      %v1096 = vld [vmem:[#allocation3 + $0x28] sm:$0xff]
      %v1097 = vld [vmem:[#allocation3 + $0x30] sm:$0xff]
      %v1098 = vld [vmem:[#allocation3 + $0x38] sm:$0xff]
      %v1099 = vld [vmem:[#allocation3 + $0x40] sm:$0xff]
      %v1100 = vld [vmem:[#allocation3 + $0x48] sm:$0xff]
      %v1101 = vld [vmem:[#allocation3 + $0x50] sm:$0xff]
      %v1102 = vld [vmem:[#allocation3 + $0x58] sm:$0xff]
      %v1103 = vld [vmem:[#allocation3 + $0x60] sm:$0xff]
      %v1104 = vld [vmem:[#allocation3 + $0x68] sm:$0xff]
      %v1105 = vld [vmem:[#allocation3 + $0x70] sm:$0xff]
      %v1106 = vld [vmem:[#allocation3 + $0x78] sm:$0xff]
      %v1107 = vadd.f32 %v1091, 1e-08
      %v1108 = vadd.f32 %v1092, 1e-08
      %v1109 = vadd.f32 %v1093, 1e-08
      %v1110 = vadd.f32 %v1094, 1e-08
      %v1111 = vadd.f32 %v1095, 1e-08
      %v1112 = vadd.f32 %v1096, 1e-08
      %v1113 = vadd.f32 %v1097, 1e-08
      %v1114 = vadd.f32 %v1098, 1e-08
      %v1115 = vadd.f32 %v1099, 1e-08
      %v1116 = vadd.f32 %v1100, 1e-08
      %v1117 = vadd.f32 %v1101, 1e-08
      %v1118 = vadd.f32 %v1102, 1e-08
      %v1119 = vadd.f32 %v1103, 1e-08
      %v1120 = vadd.f32 %v1104, 1e-08
      %v1121 = vadd.f32 %v1105, 1e-08
      %v1122 = vadd.f32 %v1106, 1e-08
      %v1123 = vlog2.pop %v1107
      %v1124 = vmul.f32 %v1123, 0.6931472
      %v1125 = vlog2.pop %v1108
      %v1126 = vmul.f32 %v1125, 0.6931472
      %v1127 = vlog2.pop %v1109
      %v1128 = vmul.f32 %v1127, 0.6931472
      %v1129 = vlog2.pop %v1110
      %v1130 = vmul.f32 %v1129, 0.6931472
      %v1131 = vlog2.pop %v1111
      %v1132 = vmul.f32 %v1131, 0.6931472
      %v1133 = vlog2.pop %v1112
      %v1134 = vmul.f32 %v1133, 0.6931472
      %v1135 = vlog2.pop %v1113
      %v1136 = vmul.f32 %v1135, 0.6931472
      %v1137 = vlog2.pop %v1114
      %v1138 = vmul.f32 %v1137, 0.6931472
      %v1139 = vlog2.pop %v1115
      %v1140 = vmul.f32 %v1139, 0.6931472
      %v1141 = vlog2.pop %v1116
      %v1142 = vmul.f32 %v1141, 0.6931472
      %v1143 = vlog2.pop %v1117
      %v1144 = vmul.f32 %v1143, 0.6931472
      %v1145 = vlog2.pop %v1118
      %v1146 = vmul.f32 %v1145, 0.6931472
      %v1147 = vlog2.pop %v1119
      %v1148 = vmul.f32 %v1147, 0.6931472
      %v1149 = vlog2.pop %v1120
      %v1150 = vmul.f32 %v1149, 0.6931472
      %v1151 = vlog2.pop %v1121
      %v1152 = vmul.f32 %v1151, 0.6931472
      %v1153 = vlog2.pop %v1122
      %v1154 = vmul.f32 %v1153, 0.6931472
      %v1155 = vadd.f32 %v1075, %v1124
      %v1156 = vadd.f32 %v1076, %v1126
      %v1157 = vadd.f32 %v1077, %v1128
      %v1158 = vadd.f32 %v1078, %v1130
      %v1159 = vadd.f32 %v1079, %v1132
      %v1160 = vadd.f32 %v1080, %v1134
      %v1161 = vadd.f32 %v1081, %v1136
      %v1162 = vadd.f32 %v1082, %v1138
      %v1163 = vadd.f32 %v1083, %v1140
      %v1164 = vadd.f32 %v1084, %v1142
      %v1165 = vadd.f32 %v1085, %v1144
      %v1166 = vadd.f32 %v1086, %v1146
      %v1167 = vadd.f32 %v1087, %v1148
      %v1168 = vadd.f32 %v1088, %v1150
      %v1169 = vadd.f32 %v1089, %v1152
      %v1170 = vadd.f32 %v1090, %v1154
      %v1171 = vld [vmem:[#allocation5] sm:$0xff]
      %v1172 = vld [vmem:[#allocation5 + $0x8] sm:$0xff]
      %v1173 = vld [vmem:[#allocation5 + $0x10] sm:$0xff]
      %v1174 = vld [vmem:[#allocation5 + $0x18] sm:$0xff]
      %v1175 = vld [vmem:[#allocation5 + $0x20] sm:$0xff]
      %v1176 = vld [vmem:[#allocation5 + $0x28] sm:$0xff]
      %v1177 = vld [vmem:[#allocation5 + $0x30] sm:$0xff]
      %v1178 = vld [vmem:[#allocation5 + $0x38] sm:$0xff]
      %v1179 = vld [vmem:[#allocation5 + $0x40] sm:$0xff]
      %v1180 = vld [vmem:[#allocation5 + $0x48] sm:$0xff]
      %v1181 = vld [vmem:[#allocation5 + $0x50] sm:$0xff]
      %v1182 = vld [vmem:[#allocation5 + $0x58] sm:$0xff]
      %v1183 = vld [vmem:[#allocation5 + $0x60] sm:$0xff]
      %v1184 = vld [vmem:[#allocation5 + $0x68] sm:$0xff]
      %v1185 = vld [vmem:[#allocation5 + $0x70] sm:$0xff]
      %v1186 = vld [vmem:[#allocation5 + $0x78] sm:$0xff]
      %v1187 = vld [vmem:[#allocation4] sm:$0xff]
      %v1188 = vld [vmem:[#allocation4 + $0x8] sm:$0xff]
      %v1189 = vld [vmem:[#allocation4 + $0x10] sm:$0xff]
      %v1190 = vld [vmem:[#allocation4 + $0x18] sm:$0xff]
      %v1191 = vld [vmem:[#allocation4 + $0x20] sm:$0xff]
      %v1192 = vld [vmem:[#allocation4 + $0x28] sm:$0xff]
      %v1193 = vld [vmem:[#allocation4 + $0x30] sm:$0xff]
      %v1194 = vld [vmem:[#allocation4 + $0x38] sm:$0xff]
      %v1195 = vld [vmem:[#allocation4 + $0x40] sm:$0xff]
      %v1196 = vld [vmem:[#allocation4 + $0x48] sm:$0xff]
      %v1197 = vld [vmem:[#allocation4 + $0x50] sm:$0xff]
      %v1198 = vld [vmem:[#allocation4 + $0x58] sm:$0xff]
      %v1199 = vld [vmem:[#allocation4 + $0x60] sm:$0xff]
      %v1200 = vld [vmem:[#allocation4 + $0x68] sm:$0xff]
      %v1201 = vld [vmem:[#allocation4 + $0x70] sm:$0xff]
      %v1202 = vld [vmem:[#allocation4 + $0x78] sm:$0xff]
      %v1203 = vmul.f32 %v1155, %v1171
      %v1204 = vmul.f32 %v1156, %v1172
      %v1205 = vmul.f32 %v1157, %v1173
      %v1206 = vmul.f32 %v1158, %v1174
      %v1207 = vmul.f32 %v1159, %v1175
      %v1208 = vmul.f32 %v1160, %v1176
      %v1209 = vmul.f32 %v1161, %v1177
      %v1210 = vmul.f32 %v1162, %v1178
      %v1211 = vmul.f32 %v1163, %v1179
      %v1212 = vmul.f32 %v1164, %v1180
      %v1213 = vmul.f32 %v1165, %v1181
      %v1214 = vmul.f32 %v1166, %v1182
      %v1215 = vmul.f32 %v1167, %v1183
      %v1216 = vmul.f32 %v1168, %v1184
      %v1217 = vmul.f32 %v1169, %v1185
      %v1218 = vmul.f32 %v1170, %v1186
      %v1219 = vsub.f32 %v1187, %v1203
      %v1220 = vsub.f32 %v1188, %v1204
      %v1221 = vsub.f32 %v1189, %v1205
      %v1222 = vsub.f32 %v1190, %v1206
      %v1223 = vsub.f32 %v1191, %v1207
      %v1224 = vsub.f32 %v1192, %v1208
      %v1225 = vsub.f32 %v1193, %v1209
      %v1226 = vsub.f32 %v1194, %v1210
      %v1227 = vsub.f32 %v1195, %v1211
      %v1228 = vsub.f32 %v1196, %v1212
      %v1229 = vsub.f32 %v1197, %v1213
      %v1230 = vsub.f32 %v1198, %v1214
      %v1231 = vsub.f32 %v1199, %v1215
      %v1232 = vsub.f32 %v1200, %v1216
      %v1233 = vsub.f32 %v1201, %v1217
      %v1234 = vsub.f32 %v1202, %v1218
      %v1235 = vadd.f32 %v1171, 1e-08
      %v1236 = vadd.f32 %v1172, 1e-08
      %v1237 = vadd.f32 %v1173, 1e-08
      %v1238 = vadd.f32 %v1174, 1e-08
      %v1239 = vadd.f32 %v1175, 1e-08
      %v1240 = vadd.f32 %v1176, 1e-08
      %v1241 = vadd.f32 %v1177, 1e-08
      %v1242 = vadd.f32 %v1178, 1e-08
      %v1243 = vadd.f32 %v1179, 1e-08
      %v1244 = vadd.f32 %v1180, 1e-08
      %v1245 = vadd.f32 %v1181, 1e-08
      %v1246 = vadd.f32 %v1182, 1e-08
      %v1247 = vadd.f32 %v1183, 1e-08
      %v1248 = vadd.f32 %v1184, 1e-08
      %v1249 = vadd.f32 %v1185, 1e-08
      %v1250 = vadd.f32 %v1186, 1e-08
      %v1251 = vrcp.pop %v1235
      %v1252 = vrcp.pop %v1236
      %v1253 = vrcp.pop %v1237
      %v1254 = vrcp.pop %v1238
      %v1255 = vrcp.pop %v1239
      %v1256 = vrcp.pop %v1240
      %v1257 = vrcp.pop %v1241
      %v1258 = vrcp.pop %v1242
      %v1259 = vrcp.pop %v1243
      %v1260 = vrcp.pop %v1244
      %v1261 = vrcp.pop %v1245
      %v1262 = vrcp.pop %v1246
      %v1263 = vrcp.pop %v1247
      %v1264 = vrcp.pop %v1248
      %v1265 = vrcp.pop %v1249
      %v1266 = vrcp.pop %v1250
      %v1267 = vmul.f32 %v1219, %v1251
      %v1268 = vmul.f32 %v1220, %v1252
      %v1269 = vmul.f32 %v1221, %v1253
      %v1270 = vmul.f32 %v1222, %v1254
      %v1271 = vmul.f32 %v1223, %v1255
      %v1272 = vmul.f32 %v1224, %v1256
      %v1273 = vmul.f32 %v1225, %v1257
      %v1274 = vmul.f32 %v1226, %v1258
      %v1275 = vmul.f32 %v1227, %v1259
      %v1276 = vmul.f32 %v1228, %v1260
      %v1277 = vmul.f32 %v1229, %v1261
      %v1278 = vmul.f32 %v1230, %v1262
      %v1279 = vmul.f32 %v1231, %v1263
      %v1280 = vmul.f32 %v1232, %v1264
      %v1281 = vmul.f32 %v1233, %v1265
      %v1282 = vmul.f32 %v1234, %v1266
      %v1283 = vmul.f32 %v1267, -1.0
      %v1284 = vmul.f32 %v1268, -1.0
      %v1285 = vmul.f32 %v1269, -1.0
      %v1286 = vmul.f32 %v1270, -1.0
      %v1287 = vmul.f32 %v1271, -1.0
      %v1288 = vmul.f32 %v1272, -1.0
      %v1289 = vmul.f32 %v1273, -1.0
      %v1290 = vmul.f32 %v1274, -1.0
      %v1291 = vmul.f32 %v1275, -1.0
      %v1292 = vmul.f32 %v1276, -1.0
      %v1293 = vmul.f32 %v1277, -1.0
      %v1294 = vmul.f32 %v1278, -1.0
      %v1295 = vmul.f32 %v1279, -1.0
      %v1296 = vmul.f32 %v1280, -1.0
      %v1297 = vmul.f32 %v1281, -1.0
      %v1298 = vmul.f32 %v1282, -1.0
      %vm1299 = vcmp.lt.s32.totalorder %v324, 8
      %vm1300 = vcmp.lt.s32.totalorder %v325, 8
      %vm1301 = vcmp.lt.s32.totalorder %v326, 8
      %vm1302 = vcmp.lt.s32.totalorder %v327, 8
      %vm1303 = vcmp.lt.s32.totalorder %v328, 8
      %vm1304 = vcmp.lt.s32.totalorder %v329, 8
      %vm1305 = vcmp.lt.s32.totalorder %v330, 8
      %vm1306 = vcmp.lt.s32.totalorder %v331, 8
      %vm1307 = vcmp.lt.s32.totalorder %v332, 8
      %vm1308 = vcmp.lt.s32.totalorder %v333, 8
      %vm1309 = vcmp.lt.s32.totalorder %v334, 8
      %vm1310 = vcmp.lt.s32.totalorder %v335, 8
      %vm1311 = vcmp.lt.s32.totalorder %v336, 8
      %vm1312 = vcmp.lt.s32.totalorder %v337, 8
      %vm1313 = vcmp.lt.s32.totalorder %v338, 8
      %vm1314 = vcmp.lt.s32.totalorder %v339, 8
      %v1315 = vsel %vm1299, %v1283, 0.0
      %v1316 = vsel %vm1300, %v1284, 0.0
      %v1317 = vsel %vm1301, %v1285, 0.0
      %v1318 = vsel %vm1302, %v1286, 0.0
      %v1319 = vsel %vm1303, %v1287, 0.0
      %v1320 = vsel %vm1304, %v1288, 0.0
      %v1321 = vsel %vm1305, %v1289, 0.0
      %v1322 = vsel %vm1306, %v1290, 0.0
      %v1323 = vsel %vm1307, %v1291, 0.0
      %v1324 = vsel %vm1308, %v1292, 0.0
      %v1325 = vsel %vm1309, %v1293, 0.0
      %v1326 = vsel %vm1310, %v1294, 0.0
      %v1327 = vsel %vm1311, %v1295, 0.0
      %v1328 = vsel %vm1312, %v1296, 0.0
      %v1329 = vsel %vm1313, %v1297, 0.0
      %v1330 = vsel %vm1314, %v1298, 0.0
      %v1331 = vsel %vm863, %v1315, 0.0
      %v1332 = vsel %vm863, %v1316, 0.0
      %v1333 = vadd.f32 %v1331, %v1332
      %v1334 = vsel %vm863, %v1317, 0.0
      %v1335 = vadd.f32 %v1333, %v1334
      %v1336 = vsel %vm863, %v1318, 0.0
      %v1337 = vadd.f32 %v1335, %v1336
      %v1338 = vsel %vm863, %v1319, 0.0
      %v1339 = vadd.f32 %v1337, %v1338
      %v1340 = vsel %vm863, %v1320, 0.0
      %v1341 = vadd.f32 %v1339, %v1340
      %v1342 = vsel %vm863, %v1321, 0.0
      %v1343 = vadd.f32 %v1341, %v1342
      %v1344 = vsel %vm863, %v1322, 0.0
      %v1345 = vadd.f32 %v1343, %v1344
      %v1346 = vsel %vm863, %v1323, 0.0
      %v1347 = vadd.f32 %v1345, %v1346
      %v1348 = vsel %vm863, %v1324, 0.0
      %v1349 = vadd.f32 %v1347, %v1348
      %v1350 = vsel %vm863, %v1325, 0.0
      %v1351 = vadd.f32 %v1349, %v1350
      %v1352 = vsel %vm863, %v1326, 0.0
      %v1353 = vadd.f32 %v1351, %v1352
      %v1354 = vsel %vm863, %v1327, 0.0
      %v1355 = vadd.f32 %v1353, %v1354
      %v1356 = vsel %vm863, %v1328, 0.0
      %v1357 = vadd.f32 %v1355, %v1356
      %v1358 = vsel %vm863, %v1329, 0.0
      %v1359 = vadd.f32 %v1357, %v1358
      %v1360 = vsel %vm863, %v1330, 0.0
      %v1361 = vadd.f32 %v1359, %v1360
      %1362 = vadd.xlane.f32.xlu0 %v1361
      %v1363 = vpop.xlane.xlu0 %1362
      %v1364 = vrot.slane %v1363, 4
      %v1365 = vadd.f32 %v1363, %v1364
      %v1366 = vrot.slane %v1365, 2
      %v1367 = vadd.f32 %v1365, %v1366
      %v1368 = vrot.slane %v1367, 1
      %v1369 = vadd.f32 %v1367, %v1368
      %s1370 = vtos %v1369
      %v1371 = vstv %s1370
      %v1372 = vadd.f32 %v1371, 0.0
      %1373 = vst [vmem:[#allocation6] sm:$0xff] %v1372
    $region25: #{tpu_custom_call.1} parent=1 // pred_fallthru
      _
    // Predicated region
    $region26: #{tpu_custom_call.1} parent=1 // pred_check
      _
    $region27: #{tpu_custom_call.1} parent=1 // pred_check_branch
      %1375 = sbr.rel (0) target = $region29
    $region28: #{tpu_custom_call.1} parent=1 // pred_region
      %s1377 = ssub.s32 128, 128
      %1378 = vsyncadd [#allocation7], %s1377
      %s1380 = sshll.u32 [#allocation6], 4
      %s1381 = int_to_ptr.vmem [resolvable:$true] %s1380
      %1383 = dma.vmem_to_hbm [thread:$0]  %s1381, 128, %s4, [#allocation7]
    $region29: #{tpu_custom_call.1} parent=1 // pred_fallthru
      _
    // Predicated region
    $region30: #{tpu_custom_call.1} parent=1 // pred_check
      _
    $region31: #{tpu_custom_call.1} parent=1 // pred_check_branch
      %1385 = sbr.rel (0) target = $region33
    $region32: #{tpu_custom_call.1} parent=1 // pred_region
      %1386 = dma.done [#allocation7], 128
    $region33: #{tpu_custom_call.1} parent=1 // pred_fallthru
      _
    %1387 = vsyncpa [#allocation7], 1

</llo_original>
